<compile_context>
chip_gen: v6e
topology: v6e:2x2x1
jax: 0.10.0
libtpu: 0.0.40
codegen_flags: <defaults>
</compile_context>

<pallas_src>
import functools

import jax
import jax.numpy as jnp
from jax.experimental import pallas as pl
from jax.experimental.pallas import tpu as pltpu

D_MODEL = 512            # backbone feature dim (classifier head hard-coded to 512)
HIDDEN = 256
NUM_CLASSES = 5
NUM_CLASSES_PAD = 128    # lane-dense logits slab; real classes sliced in wrapper
LN_EPS = 1e-5            # nn.LayerNorm default eps
PATCH = 8
TB = 8                   # batch rows per tile (sublane granularity)


def _round_up(x, m):
    return (x + m - 1) // m * m


# ---------------------------------------------------------------------------
# Kernel bodies
# ---------------------------------------------------------------------------
def _token_feature_sum(patches_ref, w_embed_ref):
    """Stand-in backbone.extract_features + per-image token sum.

    ONE merged matmul per grid step (M = TB*TN rows) and ONE accumulate,
    instead of 8 per-row matmuls + masked single-sublane RMW stores.  The
    reshapes only merge/split leading dims (last dim unchanged) so they are
    layout-free.
    """
    tb, tn, p = patches_ref.shape
    tokens = patches_ref[...].reshape(tb * tn, p)                 # bf16
    feats = jnp.dot(tokens, w_embed_ref[...],
                    preferred_element_type=jnp.float32)           # [TB*TN, 512] f32
    return jnp.sum(feats.reshape(tb, tn, D_MODEL), axis=1)        # [TB, 512]  f32


def _classifier_head(pooled, gamma_ref, beta_ref, w1_ref, b1_ref, w2_ref, b2_ref):
    """nn.LayerNorm(512) -> Dropout (identity at inference) -> Linear -> ReLU -> Linear."""
    mu = jnp.mean(pooled, axis=-1, keepdims=True)
    var = jnp.mean((pooled - mu) ** 2, axis=-1, keepdims=True)
    normed = (pooled - mu) * jax.lax.rsqrt(var + LN_EPS)
    normed = normed * gamma_ref[...] + beta_ref[...]
    h = jnp.dot(normed, w1_ref[...], preferred_element_type=jnp.float32) + b1_ref[...]
    h = jnp.maximum(h, 0.0)
    return jnp.dot(h, w2_ref[...], preferred_element_type=jnp.float32) + b2_ref[...]


def fused_kernel(patches_ref, w_embed_ref, gamma_ref, beta_ref,
                 w1_ref, b1_ref, w2_ref, b2_ref, out_ref, *, inv_n):
    """Whole token axis in one tile: no reduction grid axis, no accumulator."""
    pooled = _token_feature_sum(patches_ref, w_embed_ref) * inv_n
    out_ref[...] = _classifier_head(
        pooled, gamma_ref, beta_ref, w1_ref, b1_ref, w2_ref, b2_ref
    ).astype(out_ref.dtype)


def streamed_kernel(patches_ref, w_embed_ref, gamma_ref, beta_ref,
                    w1_ref, b1_ref, w2_ref, b2_ref, out_ref, acc_ref, *, inv_n):
    """Token axis tiled (innermost grid axis): online token-sum accumulator."""
    n_idx = pl.program_id(1)

    @pl.when(n_idx == 0)
    def _init():
        acc_ref[...] = jnp.zeros_like(acc_ref)

    acc_ref[...] += _token_feature_sum(patches_ref, w_embed_ref)

    # Classifier head: once per batch tile, after the last token tile.
    @pl.when(n_idx == pl.num_programs(1) - 1)
    def _head():
        pooled = acc_ref[...] * inv_n            # mean over the true N tokens
        out_ref[...] = _classifier_head(
            pooled, gamma_ref, beta_ref, w1_ref, b1_ref, w2_ref, b2_ref
        ).astype(out_ref.dtype)


# ---------------------------------------------------------------------------
# Wrapper
# ---------------------------------------------------------------------------
def init_params(key, patch_dim):
    k_embed, k_w1, k_w2 = jax.random.split(key, 3)

    def xavier_normal(k, shape):
        fan_in, fan_out = shape
        std = (2.0 / (fan_in + fan_out)) ** 0.5
        return (std * jax.random.normal(k, shape)).astype(jnp.float32)

    return {
        # stand-in backbone patch embedding
        "w_embed": (0.02 * jax.random.normal(k_embed, (patch_dim, D_MODEL))
                    ).astype(jnp.float32),
        # classifier head (matches nn.LayerNorm / xavier_normal_ / zeros_ init)
        "gamma": jnp.ones((1, D_MODEL), jnp.float32),
        "beta": jnp.zeros((1, D_MODEL), jnp.float32),
        "w1": xavier_normal(k_w1, (D_MODEL, HIDDEN)),
        "b1": jnp.zeros((1, HIDDEN), jnp.float32),
        "w2": xavier_normal(k_w2, (HIDDEN, NUM_CLASSES)),
        "b2": jnp.zeros((1, NUM_CLASSES), jnp.float32),
    }


def _choose_token_tile(n8, tb, p_dim, max_token_tile=None):
    """Largest token tile (multiple of 8) whose per-step VMEM cost fits budget.

    Cost per step = streamed bf16 patch tile (double-buffered) + merged-matmul
    f32 intermediate [TB*TN, 512].  36 MiB keeps the whole kernel comfortably
    under v7x's 64 MiB VMEM; for the real 224x224 / N=784 case this yields
    TN = N (single-pass path, no reduction axis).
    """
    per_token = tb * (2 * p_dim * 2 + D_MODEL * 4)
    budget = 36 << 20
    tn = min(n8, max(8, (budget // per_token) // 8 * 8))
    if max_token_tile is not None:
        tn = min(tn, _round_up(max_token_tile, 8))
    return tn


def _vmem_limit_bytes(tb, tn, p_dim):
    patches = 2 * tb * tn * p_dim * 2                    # bf16, double-buffered
    interm = tb * tn * D_MODEL * 4                       # merged-matmul f32 temp
    weights = 2 * (p_dim * D_MODEL * 2 + D_MODEL * HIDDEN * 4
                   + HIDDEN * NUM_CLASSES_PAD * 4 + 6 * D_MODEL * 4)
    need = patches + interm + weights + (8 << 20)        # margin for head temps
    return int(min(48 << 20, max(32 << 20, need)))       # <=48 MiB: safe on v7x


def _batch_axis_semantics(num_batch_tiles):
    """On v7x only CORE_PARALLEL actually shards a grid axis across the two
    TensorCores; single-TC v5e/v6e use plain PARALLEL (known-safe)."""
    try:
        kind = jax.devices()[0].device_kind.lower()
    except Exception:
        kind = ""
    if "v7" in kind and num_batch_tiles >= 2 and hasattr(pltpu, "CORE_PARALLEL"):
        return pltpu.CORE_PARALLEL
    return pltpu.PARALLEL


def micro_expression_classifier(x, params, patch_size=PATCH, max_token_tile=None):
    """x: NCHW float32 [B, 3, H, W] -> logits [B, NUM_CLASSES]."""
    B, C, H, W = x.shape
    nh, nw = H // patch_size, W // patch_size
    N = nh * nw
    P = C * patch_size * patch_size

    # Cast to bf16 BEFORE the patch-extraction transpose: the transposed HBM
    # write (and the kernel's streamed input) is half the bytes; wrapper glue
    # can rival the kernel's own traffic at 224x224.
    xb = x.astype(jnp.bfloat16)
    patches = xb.reshape(B, C, nh, patch_size, nw, patch_size)
    patches = patches.transpose(0, 2, 4, 1, 3, 5).reshape(B, N, P)

    # NOTE: no patch-dim padding.  A block last-dim equal to the full array
    # dim (192) is legal per the (8,128) rule, cuts streamed HBM bytes ~25%
    # and drops a full-tensor jnp.pad pass.  Zero padding of batch/token dims
    # leaves the math unchanged.
    b_pad = _round_up(B, TB)
    tn = _choose_token_tile(_round_up(N, 8), TB, P, max_token_tile)
    n_pad = _round_up(N, tn)
    patches = jnp.pad(patches, ((0, b_pad - B), (0, n_pad - N), (0, 0)))

    w_embed = params["w_embed"].astype(jnp.bfloat16)
    w2 = jnp.pad(params["w2"], ((0, 0), (0, NUM_CLASSES_PAD - NUM_CLASSES)))
    b2 = jnp.pad(params["b2"], ((0, 0), (0, NUM_CLASSES_PAD - NUM_CLASSES)))

    n_batch_tiles = b_pad // TB
    n_token_tiles = n_pad // tn
    batch_sem = _batch_axis_semantics(n_batch_tiles)

    # TODO(synk): weight BlockSpecs never change block index; pipeline_mode=
    # pl.Buffered(1) would skip double-buffering them (~1 MiB VMEM headroom),
    # omitted here to keep the kernel portable across Pallas versions.

    if n_token_tiles == 1:
        # Fast path: whole token axis per step -> no reduction axis/scratch.
        kernel = functools.partial(fused_kernel, inv_n=1.0 / N)
        grid = (n_batch_tiles,)
        patches_spec = pl.BlockSpec((TB, tn, P), lambda b: (b, 0, 0))
        const = lambda b: (0, 0)
        out_spec = pl.BlockSpec((TB, NUM_CLASSES_PAD), lambda b: (b, 0))
        scratch = []
        dims = (batch_sem,)
    else:
        # Fallback: stream token tiles, accumulate the token sum online.
        kernel = functools.partial(streamed_kernel, inv_n=1.0 / N)
        grid = (n_batch_tiles, n_token_tiles)
        patches_spec = pl.BlockSpec((TB, tn, P), lambda b, n: (b, n, 0))
        const = lambda b, n: (0, 0)
        out_spec = pl.BlockSpec((TB, NUM_CLASSES_PAD), lambda b, n: (b, 0))
        scratch = [pltpu.VMEM((TB, D_MODEL), jnp.float32)]
        dims = (batch_sem, pltpu.ARBITRARY)

    logits_pad = pl.pallas_call(
        kernel,
        out_shape=jax.ShapeDtypeStruct((b_pad, NUM_CLASSES_PAD), jnp.float32),
        grid_spec=pltpu.PrefetchScalarGridSpec(
            num_scalar_prefetch=0,
            grid=grid,
            in_specs=[
                patches_spec,                                     # patches (bf16)
                pl.BlockSpec((P, D_MODEL), const),                # w_embed (bf16)
                pl.BlockSpec((1, D_MODEL), const),                # gamma
                pl.BlockSpec((1, D_MODEL), const),                # beta
                pl.BlockSpec((D_MODEL, HIDDEN), const),           # w1
                pl.BlockSpec((1, HIDDEN), const),                 # b1
                pl.BlockSpec((HIDDEN, NUM_CLASSES_PAD), const),   # w2 (padded)
                pl.BlockSpec((1, NUM_CLASSES_PAD), const),        # b2 (padded)
            ],
            out_specs=out_spec,
            scratch_shapes=scratch,
        ),
        compiler_params=pltpu.CompilerParams(
            dimension_semantics=dims,
            vmem_limit_bytes=_vmem_limit_bytes(TB, tn, P),
        ),
    )(patches, w_embed, params["gamma"], params["beta"],
      params["w1"], params["b1"], w2, b2)

    return logits_pad[:B, :NUM_CLASSES]


def _reference(x, params, patch_size=PATCH):
    """Pure-JAX f32 reference of the same forward pass."""
    B, C, H, W = x.shape
    nh, nw = H // patch_size, W // patch_size
    patches = x.reshape(B, C, nh, patch_size, nw, patch_size)
    patches = patches.transpose(0, 2, 4, 1, 3, 5).reshape(
        B, nh * nw, C * patch_size * patch_size)
    feats = patches @ params["w_embed"]
    pooled = feats.mean(axis=1)
    mu = pooled.mean(-1, keepdims=True)
    var = ((pooled - mu) ** 2).mean(-1, keepdims=True)
    normed = (pooled - mu) / jnp.sqrt(var + LN_EPS)
    normed = normed * params["gamma"] + params["beta"]
    h = jnp.maximum(normed @ params["w1"] + params["b1"], 0.0)
    return h @ params["w2"] + params["b2"]


if __name__ == "__main__":
    key = jax.random.PRNGKey(0)
    k_x, k_p = jax.random.split(key)

    # Small shapes consistent with the module: NCHW images, 3 channels,
    # 32x32 spatial (224x224 in the original), patch size 8 -> 16 tokens.
    B, C, H, W = 2, 3, 32, 32
    x = jax.random.normal(k_x, (B, C, H, W), dtype=jnp.float32)

    patch_dim = C * PATCH * PATCH
    params = init_params(k_p, patch_dim)

    ref = _reference(x, params)

    # Fast path: whole token axis in one tile (no reduction grid axis).
    logits = micro_expression_classifier(x, params)
    jax.block_until_ready(logits)
    assert logits.shape == (B, NUM_CLASSES)
    # Loose tolerance: the streamed patches / embedding weights are bf16.
    err = float(jnp.max(jnp.abs(logits - ref)))
    assert err < 2e-1, f"fused path: max |kernel - ref| = {err}"

    # Also exercise the streamed (token-tiled, online-accumulator) path.
    logits_s = micro_expression_classifier(x, params, max_token_tile=8)
    jax.block_until_ready(logits_s)
    err_s = float(jnp.max(jnp.abs(logits_s - ref)))
    assert err_s < 2e-1, f"streamed path: max |kernel - ref| = {err_s}"

    print("KERNEL_OK")
</pallas_src>

<mosaic_0001>
module attributes {stable_mosaic.version = 11 : i64} {
  func.func @fused_kernel(%arg0: i32, %arg1: memref<8x16x192xbf16, #tpu.memory_space<vmem>>, %arg2: memref<192x512xbf16, #tpu.memory_space<vmem>>, %arg3: memref<1x512xf32, #tpu.memory_space<vmem>>, %arg4: memref<1x512xf32, #tpu.memory_space<vmem>>, %arg5: memref<512x256xf32, #tpu.memory_space<vmem>>, %arg6: memref<1x256xf32, #tpu.memory_space<vmem>>, %arg7: memref<256x128xf32, #tpu.memory_space<vmem>>, %arg8: memref<1x128xf32, #tpu.memory_space<vmem>>, %arg9: memref<8x128xf32, #tpu.memory_space<vmem>>) attributes {dimension_semantics = [#tpu.dimension_semantics<parallel>], iteration_bounds = array<i64: 1>, scalar_prefetch = 0 : i64, scratch_operands = 0 : i64, tpu.core_type = #tpu.core_type<tc>, window_params = [{transform_indices = @transform_0, window_bounds = array<i64: 8, 16, 192>}, {pipeline_mode = #tpu.pipeline_mode<synchronous>, transform_indices = @transform_1, window_bounds = array<i64: 192, 512>}, {pipeline_mode = #tpu.pipeline_mode<synchronous>, transform_indices = @transform_2, window_bounds = array<i64: 1, 512>}, {pipeline_mode = #tpu.pipeline_mode<synchronous>, transform_indices = @transform_3, window_bounds = array<i64: 1, 512>}, {pipeline_mode = #tpu.pipeline_mode<synchronous>, transform_indices = @transform_4, window_bounds = array<i64: 512, 256>}, {pipeline_mode = #tpu.pipeline_mode<synchronous>, transform_indices = @transform_5, window_bounds = array<i64: 1, 256>}, {pipeline_mode = #tpu.pipeline_mode<synchronous>, transform_indices = @transform_6, window_bounds = array<i64: 256, 128>}, {pipeline_mode = #tpu.pipeline_mode<synchronous>, transform_indices = @transform_7, window_bounds = array<i64: 1, 128>}, {transform_indices = @transform_8, window_bounds = array<i64: 8, 128>}]} {
    %c0 = arith.constant 0 : index
    %c0_0 = arith.constant 0 : index
    %c0_1 = arith.constant 0 : index
    %0 = vector.load %arg1[%c0, %c0_0, %c0_1] : memref<8x16x192xbf16, #tpu.memory_space<vmem>>, vector<8x16x192xbf16>
    %1 = vector.shape_cast %0 : vector<8x16x192xbf16> to vector<128x192xbf16>
    %c0_2 = arith.constant 0 : index
    %c0_3 = arith.constant 0 : index
    %2 = vector.load %arg2[%c0_2, %c0_3] : memref<192x512xbf16, #tpu.memory_space<vmem>>, vector<192x512xbf16>
    %cst = arith.constant dense<0.000000e+00> : vector<128x512xf32>
    %3 = tpu.matmul %1, %2, %cst {dimension_numbers = #tpu.dot_dimension_numbers<[1], [0], [0], [1], [0, 0, 1, 1], [], []>} : vector<128x192xbf16>, vector<192x512xbf16>, vector<128x512xf32> -> vector<128x512xf32>
    %4 = vector.shape_cast %3 : vector<128x512xf32> to vector<8x16x512xf32>
    %cst_4 = arith.constant dense<0.000000e+00> : vector<8x512xf32>
    %5 = vector.multi_reduction <add>, %4, %cst_4 [1] : vector<8x16x512xf32> to vector<8x512xf32>
    %cst_5 = arith.constant 6.250000e-02 : f32
    %6 = vector.broadcast %cst_5 : f32 to vector<8x512xf32>
    %7 = arith.mulf %5, %6 : vector<8x512xf32>
    %cst_6 = arith.constant dense<0.000000e+00> : vector<8xf32>
    %8 = vector.multi_reduction <add>, %7, %cst_6 [1] : vector<8x512xf32> to vector<8xf32>
    %9 = vector.shape_cast %8 : vector<8xf32> to vector<8x1xf32>
    %cst_7 = arith.constant 5.120000e+02 : f32
    %10 = vector.broadcast %cst_7 : f32 to vector<8x1xf32>
    %11 = arith.divf %9, %10 : vector<8x1xf32>
    %12 = vector.broadcast %11 : vector<8x1xf32> to vector<8x512xf32>
    %13 = arith.subf %7, %12 : vector<8x512xf32>
    %14 = arith.mulf %13, %13 : vector<8x512xf32>
    %cst_8 = arith.constant dense<0.000000e+00> : vector<8xf32>
    %15 = vector.multi_reduction <add>, %14, %cst_8 [1] : vector<8x512xf32> to vector<8xf32>
    %16 = vector.shape_cast %15 : vector<8xf32> to vector<8x1xf32>
    %cst_9 = arith.constant 5.120000e+02 : f32
    %17 = vector.broadcast %cst_9 : f32 to vector<8x1xf32>
    %18 = arith.divf %16, %17 : vector<8x1xf32>
    %19 = vector.broadcast %11 : vector<8x1xf32> to vector<8x512xf32>
    %20 = arith.subf %7, %19 : vector<8x512xf32>
    %cst_10 = arith.constant 9.99999974E-6 : f32
    %21 = vector.broadcast %cst_10 : f32 to vector<8x1xf32>
    %22 = arith.addf %18, %21 : vector<8x1xf32>
    %23 = math.rsqrt %22 : vector<8x1xf32>
    %24 = vector.broadcast %23 : vector<8x1xf32> to vector<8x512xf32>
    %25 = arith.mulf %20, %24 : vector<8x512xf32>
    %c0_11 = arith.constant 0 : index
    %c0_12 = arith.constant 0 : index
    %26 = vector.load %arg3[%c0_11, %c0_12] : memref<1x512xf32, #tpu.memory_space<vmem>>, vector<1x512xf32>
    %27 = vector.broadcast %26 : vector<1x512xf32> to vector<8x512xf32>
    %28 = arith.mulf %25, %27 : vector<8x512xf32>
    %c0_13 = arith.constant 0 : index
    %c0_14 = arith.constant 0 : index
    %29 = vector.load %arg4[%c0_13, %c0_14] : memref<1x512xf32, #tpu.memory_space<vmem>>, vector<1x512xf32>
    %30 = vector.broadcast %29 : vector<1x512xf32> to vector<8x512xf32>
    %31 = arith.addf %28, %30 : vector<8x512xf32>
    %c0_15 = arith.constant 0 : index
    %c0_16 = arith.constant 0 : index
    %32 = vector.load %arg5[%c0_15, %c0_16] : memref<512x256xf32, #tpu.memory_space<vmem>>, vector<512x256xf32>
    %cst_17 = arith.constant dense<0.000000e+00> : vector<8x256xf32>
    %33 = tpu.matmul %31, %32, %cst_17 {dimension_numbers = #tpu.dot_dimension_numbers<[1], [0], [0], [1], [0, 0, 1, 1], [], []>} : vector<8x512xf32>, vector<512x256xf32>, vector<8x256xf32> -> vector<8x256xf32>
    %c0_18 = arith.constant 0 : index
    %c0_19 = arith.constant 0 : index
    %34 = vector.load %arg6[%c0_18, %c0_19] : memref<1x256xf32, #tpu.memory_space<vmem>>, vector<1x256xf32>
    %35 = vector.broadcast %34 : vector<1x256xf32> to vector<8x256xf32>
    %36 = arith.addf %33, %35 : vector<8x256xf32>
    %cst_20 = arith.constant 0.000000e+00 : f32
    %37 = vector.broadcast %cst_20 : f32 to vector<8x256xf32>
    %38 = arith.maximumf %36, %37 : vector<8x256xf32>
    %c0_21 = arith.constant 0 : index
    %c0_22 = arith.constant 0 : index
    %39 = vector.load %arg7[%c0_21, %c0_22] : memref<256x128xf32, #tpu.memory_space<vmem>>, vector<256x128xf32>
    %cst_23 = arith.constant dense<0.000000e+00> : vector<8x128xf32>
    %40 = tpu.matmul %38, %39, %cst_23 {dimension_numbers = #tpu.dot_dimension_numbers<[1], [0], [0], [1], [0, 0, 1, 1], [], []>} : vector<8x256xf32>, vector<256x128xf32>, vector<8x128xf32> -> vector<8x128xf32>
    %c0_24 = arith.constant 0 : index
    %c0_25 = arith.constant 0 : index
    %41 = vector.load %arg8[%c0_24, %c0_25] : memref<1x128xf32, #tpu.memory_space<vmem>>, vector<1x128xf32>
    %42 = vector.broadcast %41 : vector<1x128xf32> to vector<8x128xf32>
    %43 = arith.addf %40, %42 : vector<8x128xf32>
    %c0_26 = arith.constant 0 : index
    %c0_27 = arith.constant 0 : index
    %44 = vector.load %arg9[%c0_26, %c0_27] : memref<8x128xf32, #tpu.memory_space<vmem>>, vector<8x128xf32>
    tpu.vector_store %arg9[%c0_26, %c0_27], %43 {strides = array<i32>} : memref<8x128xf32, #tpu.memory_space<vmem>>, vector<8x128xf32>,
    return
  }
  func.func @transform_0(%arg0: i32) -> (i32, i32, i32) {
    %c0_i32 = arith.constant 0 : i32
    %c0_i32_0 = arith.constant 0 : i32
    %c0_i32_1 = arith.constant 0 : i32
    return %arg0, %c0_i32, %c0_i32_0 : i32, i32, i32
  }
  func.func @transform_1(%arg0: i32) -> (i32, i32) {
    %c0_i32 = arith.constant 0 : i32
    %c0_i32_0 = arith.constant 0 : i32
    %c0_i32_1 = arith.constant 0 : i32
    return %c0_i32, %c0_i32_0 : i32, i32
  }
  func.func @transform_2(%arg0: i32) -> (i32, i32) {
    %c0_i32 = arith.constant 0 : i32
    %c0_i32_0 = arith.constant 0 : i32
    %c0_i32_1 = arith.constant 0 : i32
    return %c0_i32, %c0_i32_0 : i32, i32
  }
  func.func @transform_3(%arg0: i32) -> (i32, i32) {
    %c0_i32 = arith.constant 0 : i32
    %c0_i32_0 = arith.constant 0 : i32
    %c0_i32_1 = arith.constant 0 : i32
    return %c0_i32, %c0_i32_0 : i32, i32
  }
  func.func @transform_4(%arg0: i32) -> (i32, i32) {
    %c0_i32 = arith.constant 0 : i32
    %c0_i32_0 = arith.constant 0 : i32
    %c0_i32_1 = arith.constant 0 : i32
    return %c0_i32, %c0_i32_0 : i32, i32
  }
  func.func @transform_5(%arg0: i32) -> (i32, i32) {
    %c0_i32 = arith.constant 0 : i32
    %c0_i32_0 = arith.constant 0 : i32
    %c0_i32_1 = arith.constant 0 : i32
    return %c0_i32, %c0_i32_0 : i32, i32
  }
  func.func @transform_6(%arg0: i32) -> (i32, i32) {
    %c0_i32 = arith.constant 0 : i32
    %c0_i32_0 = arith.constant 0 : i32
    %c0_i32_1 = arith.constant 0 : i32
    return %c0_i32, %c0_i32_0 : i32, i32
  }
  func.func @transform_7(%arg0: i32) -> (i32, i32) {
    %c0_i32 = arith.constant 0 : i32
    %c0_i32_0 = arith.constant 0 : i32
    %c0_i32_1 = arith.constant 0 : i32
    return %c0_i32, %c0_i32_0 : i32, i32
  }
  func.func @transform_8(%arg0: i32) -> (i32, i32) {
    %c0_i32 = arith.constant 0 : i32
    %c0_i32_0 = arith.constant 0 : i32
    return %arg0, %c0_i32 : i32, i32
  }
}

</mosaic_0001>

<llo_original>
// kernel: tpu_custom_call.1
$region0: #{tpu_custom_call.1}
  #allocation0 [shape = 'u32[]', space=smem, size = 0x4, offset = 0x4, fixed_abs, tag = 'smem constant byte address 0x4 - core index']
  #allocation1 [shape = 'u32[144,128]{1,0:T(1,128)}', space=vmem, size = 0x12000, scoped, tag = 'internal scratch']
  %s0 = inlined_call_operand.hbm [shape: bf16[8,16,192], index: 0, kind: input, shape index: {}]
  %s1 = inlined_call_operand.hbm [shape: bf16[192,512], index: 1, kind: input, shape index: {}]
  %s2 = inlined_call_operand.hbm [shape: f32[1,512], index: 2, kind: input, shape index: {}]
  %s3 = inlined_call_operand.vmem [shape: f32[1,512], index: 3, kind: input, shape index: {}]
  %s4 = inlined_call_operand.hbm [shape: f32[512,256], index: 4, kind: input, shape index: {}]
  %s5 = inlined_call_operand.vmem [shape: f32[1,256], index: 5, kind: input, shape index: {}]
  %s6 = inlined_call_operand.hbm [shape: f32[256,128], index: 6, kind: input, shape index: {}]
  %s7 = inlined_call_operand.vmem [shape: f32[1,128], index: 7, kind: input, shape index: {}]
  %s8 = inlined_call_operand.hbm [shape: f32[8,128], index: 8, kind: output, shape index: {}]
  %s9 = sld [smem:[#allocation0]]
  $region62: #{tpu_custom_call.1} parent=0
    _
  %s11 = ssub.s32 1, %s9
  %s12 = scalar_select 0, %s11, %s9
  $region1: #{tpu_custom_call.1} parent=0
    #allocation2 [shape = 'u8[65536]{0}', space=vmem, size = 0x10000, scoped, tag = 'input window, operand 0, single buffered']
    #allocation3 [shape = 's32[1]{0}', space=sflag, size = 0x4, scoped, tag = 'scoped memory for tpu_custom_call.1']
    #allocation4 [shape = 's32[1]{0}', space=sflag, size = 0x4, scoped, tag = 'scoped memory for tpu_custom_call.1']
    #allocation5 [shape = 'u8[196608]{0}', space=vmem, size = 0x30000, scoped, tag = 'input window, operand 1, single buffered']
    #allocation6 [shape = 's32[1]{0}', space=sflag, size = 0x4, scoped, tag = 'scoped memory for tpu_custom_call.1']
    #allocation7 [shape = 'u8[2048]{0}', space=vmem, size = 0x800, scoped, tag = 'input window, operand 2, single buffered']
    #allocation8 [shape = 'u8[524288]{0}', space=vmem, size = 0x80000, scoped, tag = 'input window, operand 4, single buffered']
    #allocation9 [shape = 's32[1]{0}', space=sflag, size = 0x4, scoped, tag = 'scoped memory for tpu_custom_call.1']
    #allocation10 [shape = 'u8[131072]{0}', space=vmem, size = 0x20000, scoped, tag = 'input window, operand 6, single buffered']
    #allocation11 [shape = 'u8[4096]{0}', space=vmem, size = 0x1000, scoped, tag = 'output window, operand 0, single buffered']
    %13 = vsyncpa [#allocation3], 0
    %14 = vsyncpa [#allocation6], 0
    %15 = vsyncpa [#allocation9], 0
    %16 = vsyncpa [#allocation4], 0
    // Predicated region
    $region2: #{tpu_custom_call.1} parent=1 // pred_check
      _
    $region3: #{tpu_custom_call.1} parent=1 // pred_check_branch
      %18 = sbr.rel (0) target = $region5
    $region4: #{tpu_custom_call.1} parent=1 // pred_region
      %s20 = ssub.s32 2048, 2048
      %21 = vsyncadd [#allocation3], %s20
      %s22 = sshll.u32 [#allocation2], 4
      %s23 = int_to_ptr.vmem [resolvable:$true] %s22
      %28 = dma.hbm_to_vmem [thread:$0]  %s0, 2048, %s23, [#allocation3], 128, 128, 8
    $region5: #{tpu_custom_call.1} parent=1 // pred_fallthru
      _
    // Predicated region
    $region6: #{tpu_custom_call.1} parent=1 // pred_check
      _
    $region7: #{tpu_custom_call.1} parent=1 // pred_check_branch
      %30 = sbr.rel (0) target = $region9
    $region8: #{tpu_custom_call.1} parent=1 // pred_region
      %s32 = ssub.s32 6144, 6144
      %33 = vsyncadd [#allocation6], %s32
      %s34 = sshll.u32 [#allocation5], 4
      %s35 = int_to_ptr.vmem [resolvable:$true] %s34
      %40 = dma.hbm_to_vmem [thread:$0]  %s1, 6144, %s35, [#allocation6], 256, 256, 16
    $region9: #{tpu_custom_call.1} parent=1 // pred_fallthru
      _
    // Predicated region
    $region10: #{tpu_custom_call.1} parent=1 // pred_check
      _
    $region11: #{tpu_custom_call.1} parent=1 // pred_check_branch
      %42 = sbr.rel (0) target = $region13
    $region12: #{tpu_custom_call.1} parent=1 // pred_region
      %s44 = ssub.s32 64, 64
      %45 = vsyncadd [#allocation6], %s44
      %s47 = sshll.u32 [#allocation7], 4
      %s48 = int_to_ptr.vmem [resolvable:$true] %s47
      %50 = dma.hbm_to_vmem [thread:$0]  %s2, 64, %s48, [#allocation6]
    $region13: #{tpu_custom_call.1} parent=1 // pred_fallthru
      _
    // Predicated region
    $region14: #{tpu_custom_call.1} parent=1 // pred_check
      _
    $region15: #{tpu_custom_call.1} parent=1 // pred_check_branch
      %52 = sbr.rel (0) target = $region17
    $region16: #{tpu_custom_call.1} parent=1 // pred_region
      _
    $region17: #{tpu_custom_call.1} parent=1 // pred_fallthru
      _
    // Predicated region
    $region18: #{tpu_custom_call.1} parent=1 // pred_check
      _
    $region19: #{tpu_custom_call.1} parent=1 // pred_check_branch
      %54 = sbr.rel (0) target = $region21
    $region20: #{tpu_custom_call.1} parent=1 // pred_region
      %s56 = ssub.s32 16384, 16384
      %57 = vsyncadd [#allocation9], %s56
      %s58 = sshll.u32 [#allocation8], 4
      %s59 = int_to_ptr.vmem [resolvable:$true] %s58
      %64 = dma.hbm_to_vmem [thread:$0]  %s4, 16384, %s59, [#allocation9], 256, 256, 16
    $region21: #{tpu_custom_call.1} parent=1 // pred_fallthru
      _
    // Predicated region
    $region22: #{tpu_custom_call.1} parent=1 // pred_check
      _
    $region23: #{tpu_custom_call.1} parent=1 // pred_check_branch
      %66 = sbr.rel (0) target = $region25
    $region24: #{tpu_custom_call.1} parent=1 // pred_region
      _
    $region25: #{tpu_custom_call.1} parent=1 // pred_fallthru
      _
    // Predicated region
    $region26: #{tpu_custom_call.1} parent=1 // pred_check
      _
    $region27: #{tpu_custom_call.1} parent=1 // pred_check_branch
      %68 = sbr.rel (0) target = $region29
    $region28: #{tpu_custom_call.1} parent=1 // pred_region
      %s70 = ssub.s32 4096, 4096
      %71 = vsyncadd [#allocation9], %s70
      %s72 = sshll.u32 [#allocation10], 4
      %s73 = int_to_ptr.vmem [resolvable:$true] %s72
      %78 = dma.hbm_to_vmem [thread:$0]  %s6, 4096, %s73, [#allocation9], 128, 128, 8
    $region29: #{tpu_custom_call.1} parent=1 // pred_fallthru
      _
    // Predicated region
    $region30: #{tpu_custom_call.1} parent=1 // pred_check
      _
    $region31: #{tpu_custom_call.1} parent=1 // pred_check_branch
      %80 = sbr.rel (0) target = $region33
    $region32: #{tpu_custom_call.1} parent=1 // pred_region
      _
    $region33: #{tpu_custom_call.1} parent=1 // pred_fallthru
      _
    // Predicated region
    $region34: #{tpu_custom_call.1} parent=1 // pred_check
      _
    $region35: #{tpu_custom_call.1} parent=1 // pred_check_branch
      %82 = sbr.rel (0) target = $region37
    $region36: #{tpu_custom_call.1} parent=1 // pred_region
      %83 = dma.done [#allocation3], 2048
    $region37: #{tpu_custom_call.1} parent=1 // pred_fallthru
      _
    // Predicated region
    $region38: #{tpu_custom_call.1} parent=1 // pred_check
      _
    $region39: #{tpu_custom_call.1} parent=1 // pred_check_branch
      %85 = sbr.rel (0) target = $region41
    $region40: #{tpu_custom_call.1} parent=1 // pred_region
      %86 = dma.done [#allocation6], 6144
    $region41: #{tpu_custom_call.1} parent=1 // pred_fallthru
      _
    // Predicated region
    $region42: #{tpu_custom_call.1} parent=1 // pred_check
      _
    $region43: #{tpu_custom_call.1} parent=1 // pred_check_branch
      %88 = sbr.rel (0) target = $region45
    $region44: #{tpu_custom_call.1} parent=1 // pred_region
      %89 = dma.done [#allocation6], 64
    $region45: #{tpu_custom_call.1} parent=1 // pred_fallthru
      _
    // Predicated region
    $region46: #{tpu_custom_call.1} parent=1 // pred_check
      _
    $region47: #{tpu_custom_call.1} parent=1 // pred_check_branch
      %91 = sbr.rel (0) target = $region49
    $region48: #{tpu_custom_call.1} parent=1 // pred_region
      %92 = dma.done [#allocation9], 16384
    $region49: #{tpu_custom_call.1} parent=1 // pred_fallthru
      _
    // Predicated region
    $region50: #{tpu_custom_call.1} parent=1 // pred_check
      _
    $region51: #{tpu_custom_call.1} parent=1 // pred_check_branch
      %94 = sbr.rel (0) target = $region53
    $region52: #{tpu_custom_call.1} parent=1 // pred_region
      %95 = dma.done [#allocation9], 4096
    $region53: #{tpu_custom_call.1} parent=1 // pred_fallthru
      _
    %v97 = vld [vmem:[#allocation2] sm:$0xff]
    %v98 = vld [vmem:[#allocation2 + $0x8] sm:$0xff]
    %v99 = vld [vmem:[#allocation2 + $0x10] sm:$0xff]
    %v100 = vld [vmem:[#allocation2 + $0x18] sm:$0xff]
    %v101 = vld [vmem:[#allocation2 + $0x20] sm:$0xff]
    %v102 = vld [vmem:[#allocation2 + $0x28] sm:$0xff]
    %v103 = vld [vmem:[#allocation2 + $0x30] sm:$0xff]
    %v104 = vld [vmem:[#allocation2 + $0x38] sm:$0xff]
    %v105 = vld [vmem:[#allocation2 + $0x40] sm:$0xff]
    %v106 = vld [vmem:[#allocation2 + $0x48] sm:$0xff]
    %v107 = vld [vmem:[#allocation2 + $0x50] sm:$0xff]
    %v108 = vld [vmem:[#allocation2 + $0x58] sm:$0xff]
    %v109 = vld [vmem:[#allocation2 + $0x60] sm:$0xff]
    %v110 = vld [vmem:[#allocation2 + $0x68] sm:$0xff]
    %v111 = vld [vmem:[#allocation2 + $0x70] sm:$0xff]
    %v112 = vld [vmem:[#allocation2 + $0x78] sm:$0xff]
    %v113 = vld [vmem:[#allocation5] sm:$0xff]
    %v114 = vld [vmem:[#allocation5 + $0x8] sm:$0xff]
    %v115 = vld [vmem:[#allocation5 + $0x10] sm:$0xff]
    %v116 = vld [vmem:[#allocation5 + $0x18] sm:$0xff]
    %v117 = vld [vmem:[#allocation5 + $0x20] sm:$0xff]
    %v118 = vld [vmem:[#allocation5 + $0x28] sm:$0xff]
    %v119 = vld [vmem:[#allocation5 + $0x30] sm:$0xff]
    %v120 = vld [vmem:[#allocation5 + $0x38] sm:$0xff]
    %v121 = vld [vmem:[#allocation5 + $0x40] sm:$0xff]
    %v122 = vld [vmem:[#allocation5 + $0x48] sm:$0xff]
    %v123 = vld [vmem:[#allocation5 + $0x50] sm:$0xff]
    %v124 = vld [vmem:[#allocation5 + $0x58] sm:$0xff]
    %v125 = vld [vmem:[#allocation5 + $0x60] sm:$0xff]
    %v126 = vld [vmem:[#allocation5 + $0x68] sm:$0xff]
    %v127 = vld [vmem:[#allocation5 + $0x70] sm:$0xff]
    %v128 = vld [vmem:[#allocation5 + $0x78] sm:$0xff]
    %v129 = vld [vmem:[#allocation5 + $0x80] sm:$0xff]
    %v130 = vld [vmem:[#allocation5 + $0x88] sm:$0xff]
    %v131 = vld [vmem:[#allocation5 + $0x90] sm:$0xff]
    %v132 = vld [vmem:[#allocation5 + $0x98] sm:$0xff]
    %v133 = vld [vmem:[#allocation5 + $0xa0] sm:$0xff]
    %v134 = vld [vmem:[#allocation5 + $0xa8] sm:$0xff]
    %v135 = vld [vmem:[#allocation5 + $0xb0] sm:$0xff]
    %v136 = vld [vmem:[#allocation5 + $0xb8] sm:$0xff]
    %v137 = vld [vmem:[#allocation5 + $0xc0] sm:$0xff]
    %v138 = vld [vmem:[#allocation5 + $0xc8] sm:$0xff]
    %v139 = vld [vmem:[#allocation5 + $0xd0] sm:$0xff]
    %v140 = vld [vmem:[#allocation5 + $0xd8] sm:$0xff]
    %v141 = vld [vmem:[#allocation5 + $0xe0] sm:$0xff]
    %v142 = vld [vmem:[#allocation5 + $0xe8] sm:$0xff]
    %v143 = vld [vmem:[#allocation5 + $0xf0] sm:$0xff]
    %v144 = vld [vmem:[#allocation5 + $0xf8] sm:$0xff]
    %v145 = vld [vmem:[#allocation5 + $0x100] sm:$0xff]
    %v146 = vld [vmem:[#allocation5 + $0x108] sm:$0xff]
    %v147 = vld [vmem:[#allocation5 + $0x110] sm:$0xff]
    %v148 = vld [vmem:[#allocation5 + $0x118] sm:$0xff]
    %v149 = vld [vmem:[#allocation5 + $0x120] sm:$0xff]
    %v150 = vld [vmem:[#allocation5 + $0x128] sm:$0xff]
    %v151 = vld [vmem:[#allocation5 + $0x130] sm:$0xff]
    %v152 = vld [vmem:[#allocation5 + $0x138] sm:$0xff]
    %v153 = vld [vmem:[#allocation5 + $0x140] sm:$0xff]
    %v154 = vld [vmem:[#allocation5 + $0x148] sm:$0xff]
    %v155 = vld [vmem:[#allocation5 + $0x150] sm:$0xff]
    %v156 = vld [vmem:[#allocation5 + $0x158] sm:$0xff]
    %v157 = vld [vmem:[#allocation5 + $0x160] sm:$0xff]
    %v158 = vld [vmem:[#allocation5 + $0x168] sm:$0xff]
    %v159 = vld [vmem:[#allocation5 + $0x170] sm:$0xff]
    %v160 = vld [vmem:[#allocation5 + $0x178] sm:$0xff]
    %v177 = vunpack.c.l.b16 %v97
    %v178 = vunpack.c.h.b16 %v97
    %v179 = vunpack.c.l.b16 %v98
    %v180 = vunpack.c.h.b16 %v98
    %v181 = vunpack.c.l.b16 %v99
    %v182 = vunpack.c.h.b16 %v99
    %v183 = vunpack.c.l.b16 %v100
    %v184 = vunpack.c.h.b16 %v100
    %v185 = vunpack.c.l.b16 %v101
    %v186 = vunpack.c.h.b16 %v101
    %v187 = vunpack.c.l.b16 %v102
    %v188 = vunpack.c.h.b16 %v102
    %v189 = vunpack.c.l.b16 %v103
    %v190 = vunpack.c.h.b16 %v103
    %v191 = vunpack.c.l.b16 %v104
    %v192 = vunpack.c.h.b16 %v104
    %v193 = vunpack.c.l.b16 %v105
    %v194 = vunpack.c.h.b16 %v105
    %v195 = vunpack.c.l.b16 %v106
    %v196 = vunpack.c.h.b16 %v106
    %v197 = vunpack.c.l.b16 %v107
    %v198 = vunpack.c.h.b16 %v107
    %v199 = vunpack.c.l.b16 %v108
    %v200 = vunpack.c.h.b16 %v108
    %v201 = vunpack.c.l.b16 %v109
    %v202 = vunpack.c.h.b16 %v109
    %v203 = vunpack.c.l.b16 %v110
    %v204 = vunpack.c.h.b16 %v110
    %v205 = vunpack.c.l.b16 %v111
    %v206 = vunpack.c.h.b16 %v111
    %v207 = vunpack.c.l.b16 %v112
    %v208 = vunpack.c.h.b16 %v112
    %v209 = vpack.c.b16 %v179, %v177
    %v210 = vpack.c.b16 %v180, %v178
    %v211 = vpack.c.b16 %v183, %v181
    %v212 = vpack.c.b16 %v184, %v182
    %v213 = vpack.c.b16 %v187, %v185
    %v214 = vpack.c.b16 %v188, %v186
    %v215 = vpack.c.b16 %v191, %v189
    %v216 = vpack.c.b16 %v192, %v190
    %v217 = vpack.c.b16 %v195, %v193
    %v218 = vpack.c.b16 %v196, %v194
    %v219 = vpack.c.b16 %v199, %v197
    %v220 = vpack.c.b16 %v200, %v198
    %v221 = vpack.c.b16 %v203, %v201
    %v222 = vpack.c.b16 %v204, %v202
    %v223 = vpack.c.b16 %v207, %v205
    %v224 = vpack.c.b16 %v208, %v206
    %v281 = vunpack.c.l.b16 %v113
    %v282 = vunpack.c.h.b16 %v113
    %v283 = vunpack.c.l.b16 %v114
    %v284 = vunpack.c.h.b16 %v114
    %v285 = vunpack.c.l.b16 %v115
    %v286 = vunpack.c.h.b16 %v115
    %v287 = vunpack.c.l.b16 %v116
    %v288 = vunpack.c.h.b16 %v116
    %v289 = vunpack.c.l.b16 %v117
    %v290 = vunpack.c.h.b16 %v117
    %v291 = vunpack.c.l.b16 %v118
    %v292 = vunpack.c.h.b16 %v118
    %v293 = vunpack.c.l.b16 %v119
    %v294 = vunpack.c.h.b16 %v119
    %v295 = vunpack.c.l.b16 %v120
    %v296 = vunpack.c.h.b16 %v120
    %v297 = vunpack.c.l.b16 %v121
    %v298 = vunpack.c.h.b16 %v121
    %v299 = vunpack.c.l.b16 %v122
    %v300 = vunpack.c.h.b16 %v122
    %v301 = vunpack.c.l.b16 %v123
    %v302 = vunpack.c.h.b16 %v123
    %v303 = vunpack.c.l.b16 %v124
    %v304 = vunpack.c.h.b16 %v124
    %v305 = vunpack.c.l.b16 %v125
    %v306 = vunpack.c.h.b16 %v125
    %v307 = vunpack.c.l.b16 %v126
    %v308 = vunpack.c.h.b16 %v126
    %v309 = vunpack.c.l.b16 %v127
    %v310 = vunpack.c.h.b16 %v127
    %v311 = vunpack.c.l.b16 %v128
    %v312 = vunpack.c.h.b16 %v128
    %v313 = vunpack.c.l.b16 %v129
    %v314 = vunpack.c.h.b16 %v129
    %v315 = vunpack.c.l.b16 %v130
    %v316 = vunpack.c.h.b16 %v130
    %v317 = vunpack.c.l.b16 %v131
    %v318 = vunpack.c.h.b16 %v131
    %v319 = vunpack.c.l.b16 %v132
    %v320 = vunpack.c.h.b16 %v132
    %v321 = vunpack.c.l.b16 %v133
    %v322 = vunpack.c.h.b16 %v133
    %v323 = vunpack.c.l.b16 %v134
    %v324 = vunpack.c.h.b16 %v134
    %v325 = vunpack.c.l.b16 %v135
    %v326 = vunpack.c.h.b16 %v135
    %v327 = vunpack.c.l.b16 %v136
    %v328 = vunpack.c.h.b16 %v136
    %v329 = vunpack.c.l.b16 %v137
    %v330 = vunpack.c.h.b16 %v137
    %v331 = vunpack.c.l.b16 %v138
    %v332 = vunpack.c.h.b16 %v138
    %v333 = vunpack.c.l.b16 %v139
    %v334 = vunpack.c.h.b16 %v139
    %v335 = vunpack.c.l.b16 %v140
    %v336 = vunpack.c.h.b16 %v140
    %v337 = vunpack.c.l.b16 %v141
    %v338 = vunpack.c.h.b16 %v141
    %v339 = vunpack.c.l.b16 %v142
    %v340 = vunpack.c.h.b16 %v142
    %v341 = vunpack.c.l.b16 %v143
    %v342 = vunpack.c.h.b16 %v143
    %v343 = vunpack.c.l.b16 %v144
    %v344 = vunpack.c.h.b16 %v144
    %v345 = vunpack.c.l.b16 %v145
    %v346 = vunpack.c.h.b16 %v145
    %v347 = vunpack.c.l.b16 %v146
    %v348 = vunpack.c.h.b16 %v146
    %v349 = vunpack.c.l.b16 %v147
    %v350 = vunpack.c.h.b16 %v147
    %v351 = vunpack.c.l.b16 %v148
    %v352 = vunpack.c.h.b16 %v148
    %v353 = vunpack.c.l.b16 %v149
    %v354 = vunpack.c.h.b16 %v149
    %v355 = vunpack.c.l.b16 %v150
    %v356 = vunpack.c.h.b16 %v150
    %v357 = vunpack.c.l.b16 %v151
    %v358 = vunpack.c.h.b16 %v151
    %v359 = vunpack.c.l.b16 %v152
    %v360 = vunpack.c.h.b16 %v152
    %v361 = vunpack.c.l.b16 %v153
    %v362 = vunpack.c.h.b16 %v153
    %v363 = vunpack.c.l.b16 %v154
    %v364 = vunpack.c.h.b16 %v154
    %v365 = vunpack.c.l.b16 %v155
    %v366 = vunpack.c.h.b16 %v155
    %v367 = vunpack.c.l.b16 %v156
    %v368 = vunpack.c.h.b16 %v156
    %v369 = vunpack.c.l.b16 %v157
    %v370 = vunpack.c.h.b16 %v157
    %v371 = vunpack.c.l.b16 %v158
    %v372 = vunpack.c.h.b16 %v158
    %v373 = vunpack.c.l.b16 %v159
    %v374 = vunpack.c.h.b16 %v159
    %v375 = vunpack.c.l.b16 %v160
    %v376 = vunpack.c.h.b16 %v160
    %v377 = vpack.c.b16 %v285, %v281
    %v378 = vpack.c.b16 %v286, %v282
    %v379 = vpack.c.b16 %v287, %v283
    %v380 = vpack.c.b16 %v288, %v284
    %v381 = vpack.c.b16 %v293, %v289
    %v382 = vpack.c.b16 %v294, %v290
    %v383 = vpack.c.b16 %v295, %v291
    %v384 = vpack.c.b16 %v296, %v292
    %v385 = vpack.c.b16 %v301, %v297
    %v386 = vpack.c.b16 %v302, %v298
    %v387 = vpack.c.b16 %v303, %v299
    %v388 = vpack.c.b16 %v304, %v300
    %v389 = vpack.c.b16 %v309, %v305
    %v390 = vpack.c.b16 %v310, %v306
    %v391 = vpack.c.b16 %v311, %v307
    %v392 = vpack.c.b16 %v312, %v308
    %v393 = vpack.c.b16 %v317, %v313
    %v394 = vpack.c.b16 %v318, %v314
    %v395 = vpack.c.b16 %v319, %v315
    %v396 = vpack.c.b16 %v320, %v316
    %v397 = vpack.c.b16 %v325, %v321
    %v398 = vpack.c.b16 %v326, %v322
    %v399 = vpack.c.b16 %v327, %v323
    %v400 = vpack.c.b16 %v328, %v324
    %v401 = vpack.c.b16 %v333, %v329
    %v402 = vpack.c.b16 %v334, %v330
    %v403 = vpack.c.b16 %v335, %v331
    %v404 = vpack.c.b16 %v336, %v332
    %v405 = vpack.c.b16 %v341, %v337
    %v406 = vpack.c.b16 %v342, %v338
    %v407 = vpack.c.b16 %v343, %v339
    %v408 = vpack.c.b16 %v344, %v340
    %v409 = vpack.c.b16 %v349, %v345
    %v410 = vpack.c.b16 %v350, %v346
    %v411 = vpack.c.b16 %v351, %v347
    %v412 = vpack.c.b16 %v352, %v348
    %v413 = vpack.c.b16 %v357, %v353
    %v414 = vpack.c.b16 %v358, %v354
    %v415 = vpack.c.b16 %v359, %v355
    %v416 = vpack.c.b16 %v360, %v356
    %v417 = vpack.c.b16 %v365, %v361
    %v418 = vpack.c.b16 %v366, %v362
    %v419 = vpack.c.b16 %v367, %v363
    %v420 = vpack.c.b16 %v368, %v364
    %v421 = vpack.c.b16 %v373, %v369
    %v422 = vpack.c.b16 %v374, %v370
    %v423 = vpack.c.b16 %v375, %v371
    %v424 = vpack.c.b16 %v376, %v372
    %vm473 = vcmask 523264
    %v475 = vsel %vm473, %v210, 0
    %v478 = vsel %vm473, %v212, 0
    %v481 = vsel %vm473, %v214, 0
    %v484 = vsel %vm473, %v216, 0
    %v487 = vsel %vm473, %v218, 0
    %v490 = vsel %vm473, %v220, 0
    %v493 = vsel %vm473, %v222, 0
    %v496 = vsel %vm473, %v224, 0
    %498 = vmatprep.subr.bf16.mxu0 %v406
    %499 = vmatpush1.bf16.msra.mxu0 %v405
    %500 = vmatprep.subr.bf16.mxu0 %v402
    %501 = vmatpush1.bf16.msra.mxu0 %v401
    %502 = vmatprep.subr.bf16.mxu0 %v398
    %503 = vmatpush1.bf16.msra.mxu0 %v397
    %504 = vmatprep.subr.bf16.mxu0 %v394
    %505 = vmatpush1.bf16.msra.mxu0 %v393
    %506 = vmatprep.subr.bf16.mxu0 %v390
    %507 = vmatpush1.bf16.msra.mxu0 %v389
    %508 = vmatprep.subr.bf16.mxu0 %v386
    %509 = vmatpush1.bf16.msra.mxu0 %v385
    %510 = vmatprep.subr.bf16.mxu0 %v382
    %511 = vmatpush1.bf16.msra.mxu0 %v381
    %512 = vmatprep.subr.bf16.mxu0 %v378
    %513 = vmatpush1.bf16.msra.mxu0 %v377
    %514 = vmatprep.subr.bf16.mxu0 0
    %515 = vmatpush2.bf16.msra.mxu0 0
    %516 = vmatprep.subr.bf16.mxu0 0
    %517 = vmatpush2.bf16.msra.mxu0 0
    %518 = vmatprep.subr.bf16.mxu0 0
    %519 = vmatpush2.bf16.msra.mxu0 0
    %520 = vmatprep.subr.bf16.mxu0 0
    %521 = vmatpush2.bf16.msra.mxu0 0
    %522 = vmatprep.subr.bf16.mxu0 %v422
    %523 = vmatpush2.bf16.msra.mxu0 %v421
    %524 = vmatprep.subr.bf16.mxu0 %v418
    %525 = vmatpush2.bf16.msra.mxu0 %v417
    %526 = vmatprep.subr.bf16.mxu0 %v414
    %527 = vmatpush2.bf16.msra.mxu0 %v413
    %528 = vmatprep.subr.bf16.mxu0 %v410
    %529 = vmatpush2.bf16.msra.mxu0 %v409
    %530 = vmatprep.mubr.bf16.mxu0 %v475
    %531 = vmatmul.mubr.bf16.gmra.mxu0 %v209
    %v532 = vpop.f32.mrf.mxu0
    %v533 = vadd.f32 0.0, %v532
    %v534 = vpop.f32.mrf.mxu0
    %v535 = vadd.f32 0.0, %v534
    %v536 = vpop.f32.mrf.mxu0
    %v537 = vadd.f32 0.0, %v536
    %v538 = vpop.f32.mrf.mxu0
    %v539 = vadd.f32 0.0, %v538
    %540 = vmatprep.mubr.bf16.mxu0 %v478
    %541 = vmatmul.mubr.bf16.gmra.mxu0 %v211
    %v542 = vpop.f32.mrf.mxu0
    %v543 = vadd.f32 0.0, %v542
    %v544 = vpop.f32.mrf.mxu0
    %v545 = vadd.f32 0.0, %v544
    %v546 = vpop.f32.mrf.mxu0
    %v547 = vadd.f32 0.0, %v546
    %v548 = vpop.f32.mrf.mxu0
    %v549 = vadd.f32 0.0, %v548
    %550 = vmatprep.mubr.bf16.mxu0 %v481
    %551 = vmatmul.mubr.bf16.gmra.mxu0 %v213
    %v552 = vpop.f32.mrf.mxu0
    %v553 = vadd.f32 0.0, %v552
    %v554 = vpop.f32.mrf.mxu0
    %v555 = vadd.f32 0.0, %v554
    %v556 = vpop.f32.mrf.mxu0
    %v557 = vadd.f32 0.0, %v556
    %v558 = vpop.f32.mrf.mxu0
    %v559 = vadd.f32 0.0, %v558
    %560 = vmatprep.mubr.bf16.mxu0 %v484
    %561 = vmatmul.mubr.bf16.gmra.mxu0 %v215
    %v562 = vpop.f32.mrf.mxu0
    %v563 = vadd.f32 0.0, %v562
    %v564 = vpop.f32.mrf.mxu0
    %v565 = vadd.f32 0.0, %v564
    %v566 = vpop.f32.mrf.mxu0
    %v567 = vadd.f32 0.0, %v566
    %v568 = vpop.f32.mrf.mxu0
    %v569 = vadd.f32 0.0, %v568
    %570 = vmatprep.mubr.bf16.mxu0 %v487
    %571 = vmatmul.mubr.bf16.gmra.mxu0 %v217
    %v572 = vpop.f32.mrf.mxu0
    %v573 = vadd.f32 0.0, %v572
    %v574 = vpop.f32.mrf.mxu0
    %v575 = vadd.f32 0.0, %v574
    %v576 = vpop.f32.mrf.mxu0
    %v577 = vadd.f32 0.0, %v576
    %v578 = vpop.f32.mrf.mxu0
    %v579 = vadd.f32 0.0, %v578
    %580 = vmatprep.mubr.bf16.mxu0 %v490
    %581 = vmatmul.mubr.bf16.gmra.mxu0 %v219
    %v582 = vpop.f32.mrf.mxu0
    %v583 = vadd.f32 0.0, %v582
    %v584 = vpop.f32.mrf.mxu0
    %v585 = vadd.f32 0.0, %v584
    %v586 = vpop.f32.mrf.mxu0
    %v587 = vadd.f32 0.0, %v586
    %v588 = vpop.f32.mrf.mxu0
    %v589 = vadd.f32 0.0, %v588
    %590 = vmatprep.mubr.bf16.mxu0 %v493
    %591 = vmatmul.mubr.bf16.gmra.mxu0 %v221
    %v592 = vpop.f32.mrf.mxu0
    %v593 = vadd.f32 0.0, %v592
    %v594 = vpop.f32.mrf.mxu0
    %v595 = vadd.f32 0.0, %v594
    %v596 = vpop.f32.mrf.mxu0
    %v597 = vadd.f32 0.0, %v596
    %v598 = vpop.f32.mrf.mxu0
    %v599 = vadd.f32 0.0, %v598
    %600 = vmatprep.mubr.bf16.mxu0 %v496
    %601 = vmatmul.mubr.bf16.gmra.mxu0 %v223
    %v602 = vpop.f32.mrf.mxu0
    %v603 = vadd.f32 0.0, %v602
    %v604 = vpop.f32.mrf.mxu0
    %v605 = vadd.f32 0.0, %v604
    %v606 = vpop.f32.mrf.mxu0
    %v607 = vadd.f32 0.0, %v606
    %v608 = vpop.f32.mrf.mxu0
    %v609 = vadd.f32 0.0, %v608
    %610 = vdwg.mxu0
    %611 = vmatprep.subr.bf16.mxu0 %v408
    %612 = vmatpush1.bf16.msra.mxu0 %v407
    %613 = vmatprep.subr.bf16.mxu0 %v404
    %614 = vmatpush1.bf16.msra.mxu0 %v403
    %615 = vmatprep.subr.bf16.mxu0 %v400
    %616 = vmatpush1.bf16.msra.mxu0 %v399
    %617 = vmatprep.subr.bf16.mxu0 %v396
    %618 = vmatpush1.bf16.msra.mxu0 %v395
    %619 = vmatprep.subr.bf16.mxu0 %v392
    %620 = vmatpush1.bf16.msra.mxu0 %v391
    %621 = vmatprep.subr.bf16.mxu0 %v388
    %622 = vmatpush1.bf16.msra.mxu0 %v387
    %623 = vmatprep.subr.bf16.mxu0 %v384
    %624 = vmatpush1.bf16.msra.mxu0 %v383
    %625 = vmatprep.subr.bf16.mxu0 %v380
    %626 = vmatpush1.bf16.msra.mxu0 %v379
    %627 = vmatprep.subr.bf16.mxu0 0
    %628 = vmatpush2.bf16.msra.mxu0 0
    %629 = vmatprep.subr.bf16.mxu0 0
    %630 = vmatpush2.bf16.msra.mxu0 0
    %631 = vmatprep.subr.bf16.mxu0 0
    %632 = vmatpush2.bf16.msra.mxu0 0
    %633 = vmatprep.subr.bf16.mxu0 0
    %634 = vmatpush2.bf16.msra.mxu0 0
    %635 = vmatprep.subr.bf16.mxu0 %v424
    %636 = vmatpush2.bf16.msra.mxu0 %v423
    %637 = vmatprep.subr.bf16.mxu0 %v420
    %638 = vmatpush2.bf16.msra.mxu0 %v419
    %639 = vmatprep.subr.bf16.mxu0 %v416
    %640 = vmatpush2.bf16.msra.mxu0 %v415
    %641 = vmatprep.subr.bf16.mxu0 %v412
    %642 = vmatpush2.bf16.msra.mxu0 %v411
    %643 = vmatprep.mubr.bf16.mxu0 %v475
    %644 = vmatmul.mubr.bf16.gmra.mxu0 %v209
    %v645 = vpop.f32.mrf.mxu0
    %v646 = vadd.f32 0.0, %v645
    %v647 = vpop.f32.mrf.mxu0
    %v648 = vadd.f32 0.0, %v647
    %v649 = vpop.f32.mrf.mxu0
    %v650 = vadd.f32 0.0, %v649
    %v651 = vpop.f32.mrf.mxu0
    %v652 = vadd.f32 0.0, %v651
    %653 = vmatprep.mubr.bf16.mxu0 %v478
    %654 = vmatmul.mubr.bf16.gmra.mxu0 %v211
    %v655 = vpop.f32.mrf.mxu0
    %v656 = vadd.f32 0.0, %v655
    %v657 = vpop.f32.mrf.mxu0
    %v658 = vadd.f32 0.0, %v657
    %v659 = vpop.f32.mrf.mxu0
    %v660 = vadd.f32 0.0, %v659
    %v661 = vpop.f32.mrf.mxu0
    %v662 = vadd.f32 0.0, %v661
    %663 = vmatprep.mubr.bf16.mxu0 %v481
    %664 = vmatmul.mubr.bf16.gmra.mxu0 %v213
    %v665 = vpop.f32.mrf.mxu0
    %v666 = vadd.f32 0.0, %v665
    %v667 = vpop.f32.mrf.mxu0
    %v668 = vadd.f32 0.0, %v667
    %v669 = vpop.f32.mrf.mxu0
    %v670 = vadd.f32 0.0, %v669
    %v671 = vpop.f32.mrf.mxu0
    %v672 = vadd.f32 0.0, %v671
    %673 = vmatprep.mubr.bf16.mxu0 %v484
    %674 = vmatmul.mubr.bf16.gmra.mxu0 %v215
    %v675 = vpop.f32.mrf.mxu0
    %v676 = vadd.f32 0.0, %v675
    %v677 = vpop.f32.mrf.mxu0
    %v678 = vadd.f32 0.0, %v677
    %v679 = vpop.f32.mrf.mxu0
    %v680 = vadd.f32 0.0, %v679
    %v681 = vpop.f32.mrf.mxu0
    %v682 = vadd.f32 0.0, %v681
    %683 = vmatprep.mubr.bf16.mxu0 %v487
    %684 = vmatmul.mubr.bf16.gmra.mxu0 %v217
    %v685 = vpop.f32.mrf.mxu0
    %v686 = vadd.f32 0.0, %v685
    %v687 = vpop.f32.mrf.mxu0
    %v688 = vadd.f32 0.0, %v687
    %v689 = vpop.f32.mrf.mxu0
    %v690 = vadd.f32 0.0, %v689
    %v691 = vpop.f32.mrf.mxu0
    %v692 = vadd.f32 0.0, %v691
    %693 = vmatprep.mubr.bf16.mxu0 %v490
    %694 = vmatmul.mubr.bf16.gmra.mxu0 %v219
    %v695 = vpop.f32.mrf.mxu0
    %v696 = vadd.f32 0.0, %v695
    %v697 = vpop.f32.mrf.mxu0
    %v698 = vadd.f32 0.0, %v697
    %v699 = vpop.f32.mrf.mxu0
    %v700 = vadd.f32 0.0, %v699
    %v701 = vpop.f32.mrf.mxu0
    %v702 = vadd.f32 0.0, %v701
    %703 = vmatprep.mubr.bf16.mxu0 %v493
    %704 = vmatmul.mubr.bf16.gmra.mxu0 %v221
    %v705 = vpop.f32.mrf.mxu0
    %v706 = vadd.f32 0.0, %v705
    %v707 = vpop.f32.mrf.mxu0
    %v708 = vadd.f32 0.0, %v707
    %v709 = vpop.f32.mrf.mxu0
    %v710 = vadd.f32 0.0, %v709
    %v711 = vpop.f32.mrf.mxu0
    %v712 = vadd.f32 0.0, %v711
    %713 = vmatprep.mubr.bf16.mxu0 %v496
    %714 = vmatmul.mubr.bf16.gmra.mxu0 %v223
    %v715 = vpop.f32.mrf.mxu0
    %v716 = vadd.f32 0.0, %v715
    %v717 = vpop.f32.mrf.mxu0
    %v718 = vadd.f32 0.0, %v717
    %v719 = vpop.f32.mrf.mxu0
    %v720 = vadd.f32 0.0, %v719
    %v721 = vpop.f32.mrf.mxu0
    %v722 = vadd.f32 0.0, %v721
    %723 = vdwg.mxu0
    %v724 = vadd.f32 %v533, %v537
    %v725 = vrot.slane %v724, 4
    %v726 = vadd.f32 %v724, %v725
    %v727 = vrot.slane %v726, 2
    %v728 = vadd.f32 %v726, %v727
    %v729 = vrot.slane %v728, 1
    %v730 = vadd.f32 %v728, %v729
    %v731 = vadd.f32 %v535, %v539
    %v732 = vrot.slane %v731, 4
    %v733 = vadd.f32 %v731, %v732
    %v734 = vrot.slane %v733, 2
    %v735 = vadd.f32 %v733, %v734
    %v736 = vrot.slane %v735, 1
    %v737 = vadd.f32 %v735, %v736
    %v738 = vadd.f32 %v646, %v650
    %v739 = vrot.slane %v738, 4
    %v740 = vadd.f32 %v738, %v739
    %v741 = vrot.slane %v740, 2
    %v742 = vadd.f32 %v740, %v741
    %v743 = vrot.slane %v742, 1
    %v744 = vadd.f32 %v742, %v743
    %v745 = vadd.f32 %v648, %v652
    %v746 = vrot.slane %v745, 4
    %v747 = vadd.f32 %v745, %v746
    %v748 = vrot.slane %v747, 2
    %v749 = vadd.f32 %v747, %v748
    %v750 = vrot.slane %v749, 1
    %v751 = vadd.f32 %v749, %v750
    %v752 = vadd.f32 %v543, %v547
    %v753 = vrot.slane %v752, 4
    %v754 = vadd.f32 %v752, %v753
    %v755 = vrot.slane %v754, 2
    %v756 = vadd.f32 %v754, %v755
    %v757 = vrot.slane %v756, 1
    %v758 = vadd.f32 %v756, %v757
    %v759 = vadd.f32 %v545, %v549
    %v760 = vrot.slane %v759, 4
    %v761 = vadd.f32 %v759, %v760
    %v762 = vrot.slane %v761, 2
    %v763 = vadd.f32 %v761, %v762
    %v764 = vrot.slane %v763, 1
    %v765 = vadd.f32 %v763, %v764
    %v766 = vadd.f32 %v656, %v660
    %v767 = vrot.slane %v766, 4
    %v768 = vadd.f32 %v766, %v767
    %v769 = vrot.slane %v768, 2
    %v770 = vadd.f32 %v768, %v769
    %v771 = vrot.slane %v770, 1
    %v772 = vadd.f32 %v770, %v771
    %v773 = vadd.f32 %v658, %v662
    %v774 = vrot.slane %v773, 4
    %v775 = vadd.f32 %v773, %v774
    %v776 = vrot.slane %v775, 2
    %v777 = vadd.f32 %v775, %v776
    %v778 = vrot.slane %v777, 1
    %v779 = vadd.f32 %v777, %v778
    %v780 = vadd.f32 %v553, %v557
    %v781 = vrot.slane %v780, 4
    %v782 = vadd.f32 %v780, %v781
    %v783 = vrot.slane %v782, 2
    %v784 = vadd.f32 %v782, %v783
    %v785 = vrot.slane %v784, 1
    %v786 = vadd.f32 %v784, %v785
    %v787 = vadd.f32 %v555, %v559
    %v788 = vrot.slane %v787, 4
    %v789 = vadd.f32 %v787, %v788
    %v790 = vrot.slane %v789, 2
    %v791 = vadd.f32 %v789, %v790
    %v792 = vrot.slane %v791, 1
    %v793 = vadd.f32 %v791, %v792
    %v794 = vadd.f32 %v666, %v670
    %v795 = vrot.slane %v794, 4
    %v796 = vadd.f32 %v794, %v795
    %v797 = vrot.slane %v796, 2
    %v798 = vadd.f32 %v796, %v797
    %v799 = vrot.slane %v798, 1
    %v800 = vadd.f32 %v798, %v799
    %v801 = vadd.f32 %v668, %v672
    %v802 = vrot.slane %v801, 4
    %v803 = vadd.f32 %v801, %v802
    %v804 = vrot.slane %v803, 2
    %v805 = vadd.f32 %v803, %v804
    %v806 = vrot.slane %v805, 1
    %v807 = vadd.f32 %v805, %v806
    %v808 = vadd.f32 %v563, %v567
    %v809 = vrot.slane %v808, 4
    %v810 = vadd.f32 %v808, %v809
    %v811 = vrot.slane %v810, 2
    %v812 = vadd.f32 %v810, %v811
    %v813 = vrot.slane %v812, 1
    %v814 = vadd.f32 %v812, %v813
    %v815 = vadd.f32 %v565, %v569
    %v816 = vrot.slane %v815, 4
    %v817 = vadd.f32 %v815, %v816
    %v818 = vrot.slane %v817, 2
    %v819 = vadd.f32 %v817, %v818
    %v820 = vrot.slane %v819, 1
    %v821 = vadd.f32 %v819, %v820
    %v822 = vadd.f32 %v676, %v680
    %v823 = vrot.slane %v822, 4
    %v824 = vadd.f32 %v822, %v823
    %v825 = vrot.slane %v824, 2
    %v826 = vadd.f32 %v824, %v825
    %v827 = vrot.slane %v826, 1
    %v828 = vadd.f32 %v826, %v827
    %v829 = vadd.f32 %v678, %v682
    %v830 = vrot.slane %v829, 4
    %v831 = vadd.f32 %v829, %v830
    %v832 = vrot.slane %v831, 2
    %v833 = vadd.f32 %v831, %v832
    %v834 = vrot.slane %v833, 1
    %v835 = vadd.f32 %v833, %v834
    %v836 = vadd.f32 %v573, %v577
    %v837 = vrot.slane %v836, 4
    %v838 = vadd.f32 %v836, %v837
    %v839 = vrot.slane %v838, 2
    %v840 = vadd.f32 %v838, %v839
    %v841 = vrot.slane %v840, 1
    %v842 = vadd.f32 %v840, %v841
    %v843 = vadd.f32 %v575, %v579
    %v844 = vrot.slane %v843, 4
    %v845 = vadd.f32 %v843, %v844
    %v846 = vrot.slane %v845, 2
    %v847 = vadd.f32 %v845, %v846
    %v848 = vrot.slane %v847, 1
    %v849 = vadd.f32 %v847, %v848
    %v850 = vadd.f32 %v686, %v690
    %v851 = vrot.slane %v850, 4
    %v852 = vadd.f32 %v850, %v851
    %v853 = vrot.slane %v852, 2
    %v854 = vadd.f32 %v852, %v853
    %v855 = vrot.slane %v854, 1
    %v856 = vadd.f32 %v854, %v855
    %v857 = vadd.f32 %v688, %v692
    %v858 = vrot.slane %v857, 4
    %v859 = vadd.f32 %v857, %v858
    %v860 = vrot.slane %v859, 2
    %v861 = vadd.f32 %v859, %v860
    %v862 = vrot.slane %v861, 1
    %v863 = vadd.f32 %v861, %v862
    %v864 = vadd.f32 %v583, %v587
    %v865 = vrot.slane %v864, 4
    %v866 = vadd.f32 %v864, %v865
    %v867 = vrot.slane %v866, 2
    %v868 = vadd.f32 %v866, %v867
    %v869 = vrot.slane %v868, 1
    %v870 = vadd.f32 %v868, %v869
    %v871 = vadd.f32 %v585, %v589
    %v872 = vrot.slane %v871, 4
    %v873 = vadd.f32 %v871, %v872
    %v874 = vrot.slane %v873, 2
    %v875 = vadd.f32 %v873, %v874
    %v876 = vrot.slane %v875, 1
    %v877 = vadd.f32 %v875, %v876
    %v878 = vadd.f32 %v696, %v700
    %v879 = vrot.slane %v878, 4
    %v880 = vadd.f32 %v878, %v879
    %v881 = vrot.slane %v880, 2
    %v882 = vadd.f32 %v880, %v881
    %v883 = vrot.slane %v882, 1
    %v884 = vadd.f32 %v882, %v883
    %v885 = vadd.f32 %v698, %v702
    %v886 = vrot.slane %v885, 4
    %v887 = vadd.f32 %v885, %v886
    %v888 = vrot.slane %v887, 2
    %v889 = vadd.f32 %v887, %v888
    %v890 = vrot.slane %v889, 1
    %v891 = vadd.f32 %v889, %v890
    %v892 = vadd.f32 %v593, %v597
    %v893 = vrot.slane %v892, 4
    %v894 = vadd.f32 %v892, %v893
    %v895 = vrot.slane %v894, 2
    %v896 = vadd.f32 %v894, %v895
    %v897 = vrot.slane %v896, 1
    %v898 = vadd.f32 %v896, %v897
    %v899 = vadd.f32 %v595, %v599
    %v900 = vrot.slane %v899, 4
    %v901 = vadd.f32 %v899, %v900
    %v902 = vrot.slane %v901, 2
    %v903 = vadd.f32 %v901, %v902
    %v904 = vrot.slane %v903, 1
    %v905 = vadd.f32 %v903, %v904
    %v906 = vadd.f32 %v706, %v710
    %v907 = vrot.slane %v906, 4
    %v908 = vadd.f32 %v906, %v907
    %v909 = vrot.slane %v908, 2
    %v910 = vadd.f32 %v908, %v909
    %v911 = vrot.slane %v910, 1
    %v912 = vadd.f32 %v910, %v911
    %v913 = vadd.f32 %v708, %v712
    %v914 = vrot.slane %v913, 4
    %v915 = vadd.f32 %v913, %v914
    %v916 = vrot.slane %v915, 2
    %v917 = vadd.f32 %v915, %v916
    %v918 = vrot.slane %v917, 1
    %v919 = vadd.f32 %v917, %v918
    %v920 = vadd.f32 %v603, %v607
    %v921 = vrot.slane %v920, 4
    %v922 = vadd.f32 %v920, %v921
    %v923 = vrot.slane %v922, 2
    %v924 = vadd.f32 %v922, %v923
    %v925 = vrot.slane %v924, 1
    %v926 = vadd.f32 %v924, %v925
    %v927 = vadd.f32 %v605, %v609
    %v928 = vrot.slane %v927, 4
    %v929 = vadd.f32 %v927, %v928
    %v930 = vrot.slane %v929, 2
    %v931 = vadd.f32 %v929, %v930
    %v932 = vrot.slane %v931, 1
    %v933 = vadd.f32 %v931, %v932
    %v934 = vadd.f32 %v716, %v720
    %v935 = vrot.slane %v934, 4
    %v936 = vadd.f32 %v934, %v935
    %v937 = vrot.slane %v936, 2
    %v938 = vadd.f32 %v936, %v937
    %v939 = vrot.slane %v938, 1
    %v940 = vadd.f32 %v938, %v939
    %v941 = vadd.f32 %v718, %v722
    %v942 = vrot.slane %v941, 4
    %v943 = vadd.f32 %v941, %v942
    %v944 = vrot.slane %v943, 2
    %v945 = vadd.f32 %v943, %v944
    %v946 = vrot.slane %v945, 1
    %v947 = vadd.f32 %v945, %v946
    %v948 = vmul.f32 %v730, 0.0625
    %v949 = vmul.f32 %v737, 0.0625
    %v950 = vmul.f32 %v744, 0.0625
    %v951 = vmul.f32 %v751, 0.0625
    %v952 = vmul.f32 %v758, 0.0625
    %v953 = vmul.f32 %v765, 0.0625
    %v954 = vmul.f32 %v772, 0.0625
    %v955 = vmul.f32 %v779, 0.0625
    %v956 = vmul.f32 %v786, 0.0625
    %v957 = vmul.f32 %v793, 0.0625
    %v958 = vmul.f32 %v800, 0.0625
    %v959 = vmul.f32 %v807, 0.0625
    %v960 = vmul.f32 %v814, 0.0625
    %v961 = vmul.f32 %v821, 0.0625
    %v962 = vmul.f32 %v828, 0.0625
    %v963 = vmul.f32 %v835, 0.0625
    %v964 = vmul.f32 %v842, 0.0625
    %v965 = vmul.f32 %v849, 0.0625
    %v966 = vmul.f32 %v856, 0.0625
    %v967 = vmul.f32 %v863, 0.0625
    %v968 = vmul.f32 %v870, 0.0625
    %v969 = vmul.f32 %v877, 0.0625
    %v970 = vmul.f32 %v884, 0.0625
    %v971 = vmul.f32 %v891, 0.0625
    %v972 = vmul.f32 %v898, 0.0625
    %v973 = vmul.f32 %v905, 0.0625
    %v974 = vmul.f32 %v912, 0.0625
    %v975 = vmul.f32 %v919, 0.0625
    %v976 = vmul.f32 %v926, 0.0625
    %v977 = vmul.f32 %v933, 0.0625
    %v978 = vmul.f32 %v940, 0.0625
    %v979 = vmul.f32 %v947, 0.0625
    %vm1012 = vcmask 1041409
    %v1013 = vsel %vm1012, %v952, %v948
    %vm1014 = vcmask 1042434
    %v1015 = vsel %vm1014, %v956, %v1013
    %vm1016 = vcmask 1043459
    %v1017 = vsel %vm1016, %v960, %v1015
    %vm1018 = vcmask 1044484
    %v1019 = vsel %vm1018, %v964, %v1017
    %vm1020 = vcmask 1045509
    %v1021 = vsel %vm1020, %v968, %v1019
    %vm1022 = vcmask 1046534
    %v1023 = vsel %vm1022, %v972, %v1021
    %vm1024 = vcmask 1047559
    %v1025 = vsel %vm1024, %v976, %v1023
    %v1026 = vsel %vm1012, %v953, %v949
    %v1027 = vsel %vm1014, %v957, %v1026
    %v1028 = vsel %vm1016, %v961, %v1027
    %v1029 = vsel %vm1018, %v965, %v1028
    %v1030 = vsel %vm1020, %v969, %v1029
    %v1031 = vsel %vm1022, %v973, %v1030
    %v1032 = vsel %vm1024, %v977, %v1031
    %v1033 = vsel %vm1012, %v954, %v950
    %v1034 = vsel %vm1014, %v958, %v1033
    %v1035 = vsel %vm1016, %v962, %v1034
    %v1036 = vsel %vm1018, %v966, %v1035
    %v1037 = vsel %vm1020, %v970, %v1036
    %v1038 = vsel %vm1022, %v974, %v1037
    %v1039 = vsel %vm1024, %v978, %v1038
    %v1040 = vsel %vm1012, %v955, %v951
    %v1041 = vsel %vm1014, %v959, %v1040
    %v1042 = vsel %vm1016, %v963, %v1041
    %v1043 = vsel %vm1018, %v967, %v1042
    %v1044 = vsel %vm1020, %v971, %v1043
    %v1045 = vsel %vm1022, %v975, %v1044
    %v1046 = vsel %vm1024, %v979, %v1045
    %v1051 = vadd.f32 %v1025, %v1032
    %v1052 = vadd.f32 %v1051, %v1039
    %v1053 = vadd.f32 %v1052, %v1046
    %1054 = vadd.xlane.f32.xlu0 %v1053
    %v1055 = vpop.xlane.xlu0 %1054
    %v1056 = vrcp.pop 512.0
    %v1057 = vmul.f32 %v1055, %v1056
    %v1059 = vrot.slane %v1057, 1
    %v1060 = vrot.slane %v1057, 2
    %v1061 = vrot.slane %v1057, 3
    %v1062 = vrot.slane %v1057, 4
    %v1063 = vrot.slane %v1057, 5
    %v1064 = vrot.slane %v1057, 6
    %v1065 = vrot.slane %v1057, 7
    %v1074 = vsub.f32 %v948, %v1057
    %v1075 = vsub.f32 %v949, %v1057
    %v1076 = vsub.f32 %v950, %v1057
    %v1077 = vsub.f32 %v951, %v1057
    %v1078 = vsub.f32 %v952, %v1059
    %v1079 = vsub.f32 %v953, %v1059
    %v1080 = vsub.f32 %v954, %v1059
    %v1081 = vsub.f32 %v955, %v1059
    %v1082 = vsub.f32 %v956, %v1060
    %v1083 = vsub.f32 %v957, %v1060
    %v1084 = vsub.f32 %v958, %v1060
    %v1085 = vsub.f32 %v959, %v1060
    %v1086 = vsub.f32 %v960, %v1061
    %v1087 = vsub.f32 %v961, %v1061
    %v1088 = vsub.f32 %v962, %v1061
    %v1089 = vsub.f32 %v963, %v1061
    %v1090 = vsub.f32 %v964, %v1062
    %v1091 = vsub.f32 %v965, %v1062
    %v1092 = vsub.f32 %v966, %v1062
    %v1093 = vsub.f32 %v967, %v1062
    %v1094 = vsub.f32 %v968, %v1063
    %v1095 = vsub.f32 %v969, %v1063
    %v1096 = vsub.f32 %v970, %v1063
    %v1097 = vsub.f32 %v971, %v1063
    %v1098 = vsub.f32 %v972, %v1064
    %v1099 = vsub.f32 %v973, %v1064
    %v1100 = vsub.f32 %v974, %v1064
    %v1101 = vsub.f32 %v975, %v1064
    %v1102 = vsub.f32 %v976, %v1065
    %v1103 = vsub.f32 %v977, %v1065
    %v1104 = vsub.f32 %v978, %v1065
    %v1105 = vsub.f32 %v979, %v1065
    %v1106 = vmul.f32 %v1074, %v1074
    %v1107 = vmul.f32 %v1075, %v1075
    %v1108 = vmul.f32 %v1076, %v1076
    %v1109 = vmul.f32 %v1077, %v1077
    %v1110 = vmul.f32 %v1078, %v1078
    %v1111 = vmul.f32 %v1079, %v1079
    %v1112 = vmul.f32 %v1080, %v1080
    %v1113 = vmul.f32 %v1081, %v1081
    %v1114 = vmul.f32 %v1082, %v1082
    %v1115 = vmul.f32 %v1083, %v1083
    %v1116 = vmul.f32 %v1084, %v1084
    %v1117 = vmul.f32 %v1085, %v1085
    %v1118 = vmul.f32 %v1086, %v1086
    %v1119 = vmul.f32 %v1087, %v1087
    %v1120 = vmul.f32 %v1088, %v1088
    %v1121 = vmul.f32 %v1089, %v1089
    %v1122 = vmul.f32 %v1090, %v1090
    %v1123 = vmul.f32 %v1091, %v1091
    %v1124 = vmul.f32 %v1092, %v1092
    %v1125 = vmul.f32 %v1093, %v1093
    %v1126 = vmul.f32 %v1094, %v1094
    %v1127 = vmul.f32 %v1095, %v1095
    %v1128 = vmul.f32 %v1096, %v1096
    %v1129 = vmul.f32 %v1097, %v1097
    %v1130 = vmul.f32 %v1098, %v1098
    %v1131 = vmul.f32 %v1099, %v1099
    %v1132 = vmul.f32 %v1100, %v1100
    %v1133 = vmul.f32 %v1101, %v1101
    %v1134 = vmul.f32 %v1102, %v1102
    %v1135 = vmul.f32 %v1103, %v1103
    %v1136 = vmul.f32 %v1104, %v1104
    %v1137 = vmul.f32 %v1105, %v1105
    %v1170 = vrot.slane %v1110, 7
    %v1171 = vsel %vm1012, %v1170, %v1106
    %v1172 = vrot.slane %v1114, 6
    %v1173 = vsel %vm1014, %v1172, %v1171
    %v1174 = vrot.slane %v1118, 5
    %v1175 = vsel %vm1016, %v1174, %v1173
    %v1176 = vrot.slane %v1122, 4
    %v1177 = vsel %vm1018, %v1176, %v1175
    %v1178 = vrot.slane %v1126, 3
    %v1179 = vsel %vm1020, %v1178, %v1177
    %v1180 = vrot.slane %v1130, 2
    %v1181 = vsel %vm1022, %v1180, %v1179
    %v1182 = vrot.slane %v1134, 1
    %v1183 = vsel %vm1024, %v1182, %v1181
    %v1184 = vrot.slane %v1111, 7
    %v1185 = vsel %vm1012, %v1184, %v1107
    %v1186 = vrot.slane %v1115, 6
    %v1187 = vsel %vm1014, %v1186, %v1185
    %v1188 = vrot.slane %v1119, 5
    %v1189 = vsel %vm1016, %v1188, %v1187
    %v1190 = vrot.slane %v1123, 4
    %v1191 = vsel %vm1018, %v1190, %v1189
    %v1192 = vrot.slane %v1127, 3
    %v1193 = vsel %vm1020, %v1192, %v1191
    %v1194 = vrot.slane %v1131, 2
    %v1195 = vsel %vm1022, %v1194, %v1193
    %v1196 = vrot.slane %v1135, 1
    %v1197 = vsel %vm1024, %v1196, %v1195
    %v1198 = vrot.slane %v1112, 7
    %v1199 = vsel %vm1012, %v1198, %v1108
    %v1200 = vrot.slane %v1116, 6
    %v1201 = vsel %vm1014, %v1200, %v1199
    %v1202 = vrot.slane %v1120, 5
    %v1203 = vsel %vm1016, %v1202, %v1201
    %v1204 = vrot.slane %v1124, 4
    %v1205 = vsel %vm1018, %v1204, %v1203
    %v1206 = vrot.slane %v1128, 3
    %v1207 = vsel %vm1020, %v1206, %v1205
    %v1208 = vrot.slane %v1132, 2
    %v1209 = vsel %vm1022, %v1208, %v1207
    %v1210 = vrot.slane %v1136, 1
    %v1211 = vsel %vm1024, %v1210, %v1209
    %v1212 = vrot.slane %v1113, 7
    %v1213 = vsel %vm1012, %v1212, %v1109
    %v1214 = vrot.slane %v1117, 6
    %v1215 = vsel %vm1014, %v1214, %v1213
    %v1216 = vrot.slane %v1121, 5
    %v1217 = vsel %vm1016, %v1216, %v1215
    %v1218 = vrot.slane %v1125, 4
    %v1219 = vsel %vm1018, %v1218, %v1217
    %v1220 = vrot.slane %v1129, 3
    %v1221 = vsel %vm1020, %v1220, %v1219
    %v1222 = vrot.slane %v1133, 2
    %v1223 = vsel %vm1022, %v1222, %v1221
    %v1224 = vrot.slane %v1137, 1
    %v1225 = vsel %vm1024, %v1224, %v1223
    %v1230 = vadd.f32 %v1183, %v1197
    %v1231 = vadd.f32 %v1230, %v1211
    %v1232 = vadd.f32 %v1231, %v1225
    %1233 = vadd.xlane.f32.xlu0 %v1232
    %v1234 = vpop.xlane.xlu0 %1233
    %v1235 = vmul.f32 %v1234, %v1056
    %v1236 = vadd.f32 %v1235, 1e-05
    %v1237 = vrsqrt.pop %v1236
    %v1239 = vrot.slane %v1237, 1
    %v1240 = vrot.slane %v1237, 2
    %v1241 = vrot.slane %v1237, 3
    %v1242 = vrot.slane %v1237, 4
    %v1243 = vrot.slane %v1237, 5
    %v1244 = vrot.slane %v1237, 6
    %v1245 = vrot.slane %v1237, 7
    %v1254 = vmul.f32 %v1074, %v1237
    %v1255 = vmul.f32 %v1075, %v1237
    %v1256 = vmul.f32 %v1076, %v1237
    %v1257 = vmul.f32 %v1077, %v1237
    %v1258 = vmul.f32 %v1078, %v1239
    %v1259 = vmul.f32 %v1079, %v1239
    %v1260 = vmul.f32 %v1080, %v1239
    %v1261 = vmul.f32 %v1081, %v1239
    %v1262 = vmul.f32 %v1082, %v1240
    %v1263 = vmul.f32 %v1083, %v1240
    %v1264 = vmul.f32 %v1084, %v1240
    %v1265 = vmul.f32 %v1085, %v1240
    %v1266 = vmul.f32 %v1086, %v1241
    %v1267 = vmul.f32 %v1087, %v1241
    %v1268 = vmul.f32 %v1088, %v1241
    %v1269 = vmul.f32 %v1089, %v1241
    %v1270 = vmul.f32 %v1090, %v1242
    %v1271 = vmul.f32 %v1091, %v1242
    %v1272 = vmul.f32 %v1092, %v1242
    %v1273 = vmul.f32 %v1093, %v1242
    %v1274 = vmul.f32 %v1094, %v1243
    %v1275 = vmul.f32 %v1095, %v1243
    %v1276 = vmul.f32 %v1096, %v1243
    %v1277 = vmul.f32 %v1097, %v1243
    %v1278 = vmul.f32 %v1098, %v1244
    %v1279 = vmul.f32 %v1099, %v1244
    %v1280 = vmul.f32 %v1100, %v1244
    %v1281 = vmul.f32 %v1101, %v1244
    %v1282 = vmul.f32 %v1102, %v1245
    %v1283 = vmul.f32 %v1103, %v1245
    %v1284 = vmul.f32 %v1104, %v1245
    %v1285 = vmul.f32 %v1105, %v1245
    %v1286 = vld [vmem:[#allocation7] sm:$0xf]
    %v1288 = vlaneseq
    %v1289 = vshrl.u32 %v1288, 7
    %v1290 = vsub.s32 0, %v1289
    %v1291 = vrot.slane %v1286, %v1290
    %v1292 = vlaneseq
    %v1293 = vshrl.u32 %v1292, 7
    %v1294 = vsub.s32 1, %v1293
    %v1295 = vrot.slane %v1286, %v1294
    %v1296 = vlaneseq
    %v1297 = vshrl.u32 %v1296, 7
    %v1298 = vsub.s32 2, %v1297
    %v1299 = vrot.slane %v1286, %v1298
    %v1300 = vlaneseq
    %v1301 = vshrl.u32 %v1300, 7
    %v1302 = vsub.s32 3, %v1301
    %v1303 = vrot.slane %v1286, %v1302
    %v1308 = vmul.f32 %v1254, %v1291
    %v1309 = vmul.f32 %v1255, %v1295
    %v1310 = vmul.f32 %v1256, %v1299
    %v1311 = vmul.f32 %v1257, %v1303
    %v1312 = vmul.f32 %v1258, %v1291
    %v1313 = vmul.f32 %v1259, %v1295
    %v1314 = vmul.f32 %v1260, %v1299
    %v1315 = vmul.f32 %v1261, %v1303
    %v1316 = vmul.f32 %v1262, %v1291
    %v1317 = vmul.f32 %v1263, %v1295
    %v1318 = vmul.f32 %v1264, %v1299
    %v1319 = vmul.f32 %v1265, %v1303
    %v1320 = vmul.f32 %v1266, %v1291
    %v1321 = vmul.f32 %v1267, %v1295
    %v1322 = vmul.f32 %v1268, %v1299
    %v1323 = vmul.f32 %v1269, %v1303
    %v1324 = vmul.f32 %v1270, %v1291
    %v1325 = vmul.f32 %v1271, %v1295
    %v1326 = vmul.f32 %v1272, %v1299
    %v1327 = vmul.f32 %v1273, %v1303
    %v1328 = vmul.f32 %v1274, %v1291
    %v1329 = vmul.f32 %v1275, %v1295
    %v1330 = vmul.f32 %v1276, %v1299
    %v1331 = vmul.f32 %v1277, %v1303
    %v1332 = vmul.f32 %v1278, %v1291
    %v1333 = vmul.f32 %v1279, %v1295
    %v1334 = vmul.f32 %v1280, %v1299
    %v1335 = vmul.f32 %v1281, %v1303
    %v1336 = vmul.f32 %v1282, %v1291
    %v1337 = vmul.f32 %v1283, %v1295
    %v1338 = vmul.f32 %v1284, %v1299
    %v1339 = vmul.f32 %v1285, %v1303
    %v1340 = vld [vmem:[%s3] sm:$0xf]
    %v1342 = vlaneseq
    %v1343 = vshrl.u32 %v1342, 7
    %v1344 = vsub.s32 0, %v1343
    %v1345 = vrot.slane %v1340, %v1344
    %v1346 = vlaneseq
    %v1347 = vshrl.u32 %v1346, 7
    %v1348 = vsub.s32 1, %v1347
    %v1349 = vrot.slane %v1340, %v1348
    %v1350 = vlaneseq
    %v1351 = vshrl.u32 %v1350, 7
    %v1352 = vsub.s32 2, %v1351
    %v1353 = vrot.slane %v1340, %v1352
    %v1354 = vlaneseq
    %v1355 = vshrl.u32 %v1354, 7
    %v1356 = vsub.s32 3, %v1355
    %v1357 = vrot.slane %v1340, %v1356
    %v1362 = vadd.f32 %v1308, %v1345
    %v1363 = vadd.f32 %v1309, %v1349
    %v1364 = vadd.f32 %v1310, %v1353
    %v1365 = vadd.f32 %v1311, %v1357
    %v1366 = vadd.f32 %v1312, %v1345
    %v1367 = vadd.f32 %v1313, %v1349
    %v1368 = vadd.f32 %v1314, %v1353
    %v1369 = vadd.f32 %v1315, %v1357
    %v1370 = vadd.f32 %v1316, %v1345
    %v1371 = vadd.f32 %v1317, %v1349
    %v1372 = vadd.f32 %v1318, %v1353
    %v1373 = vadd.f32 %v1319, %v1357
    %v1374 = vadd.f32 %v1320, %v1345
    %v1375 = vadd.f32 %v1321, %v1349
    %v1376 = vadd.f32 %v1322, %v1353
    %v1377 = vadd.f32 %v1323, %v1357
    %v1378 = vadd.f32 %v1324, %v1345
    %v1379 = vadd.f32 %v1325, %v1349
    %v1380 = vadd.f32 %v1326, %v1353
    %v1381 = vadd.f32 %v1327, %v1357
    %v1382 = vadd.f32 %v1328, %v1345
    %v1383 = vadd.f32 %v1329, %v1349
    %v1384 = vadd.f32 %v1330, %v1353
    %v1385 = vadd.f32 %v1331, %v1357
    %v1386 = vadd.f32 %v1332, %v1345
    %v1387 = vadd.f32 %v1333, %v1349
    %v1388 = vadd.f32 %v1334, %v1353
    %v1389 = vadd.f32 %v1335, %v1357
    %v1390 = vadd.f32 %v1336, %v1345
    %v1391 = vadd.f32 %v1337, %v1349
    %v1392 = vadd.f32 %v1338, %v1353
    %v1393 = vadd.f32 %v1339, %v1357
    %v1394 = vld [vmem:[#allocation8] sm:$0xff]
    %v1395 = vld [vmem:[#allocation8 + $0x8] sm:$0xff]
    %v1396 = vld [vmem:[#allocation8 + $0x10] sm:$0xff]
    %v1397 = vld [vmem:[#allocation8 + $0x18] sm:$0xff]
    %v1398 = vld [vmem:[#allocation8 + $0x20] sm:$0xff]
    %v1399 = vld [vmem:[#allocation8 + $0x28] sm:$0xff]
    %v1400 = vld [vmem:[#allocation8 + $0x30] sm:$0xff]
    %v1401 = vld [vmem:[#allocation8 + $0x38] sm:$0xff]
    %v1402 = vld [vmem:[#allocation8 + $0x40] sm:$0xff]
    %v1403 = vld [vmem:[#allocation8 + $0x48] sm:$0xff]
    %v1404 = vld [vmem:[#allocation8 + $0x50] sm:$0xff]
    %v1405 = vld [vmem:[#allocation8 + $0x58] sm:$0xff]
    %v1406 = vld [vmem:[#allocation8 + $0x60] sm:$0xff]
    %v1407 = vld [vmem:[#allocation8 + $0x68] sm:$0xff]
    %v1408 = vld [vmem:[#allocation8 + $0x70] sm:$0xff]
    %v1409 = vld [vmem:[#allocation8 + $0x78] sm:$0xff]
    %v1410 = vld [vmem:[#allocation8 + $0x80] sm:$0xff]
    %v1411 = vld [vmem:[#allocation8 + $0x88] sm:$0xff]
    %v1412 = vld [vmem:[#allocation8 + $0x90] sm:$0xff]
    %v1413 = vld [vmem:[#allocation8 + $0x98] sm:$0xff]
    %v1414 = vld [vmem:[#allocation8 + $0xa0] sm:$0xff]
    %v1415 = vld [vmem:[#allocation8 + $0xa8] sm:$0xff]
    %v1416 = vld [vmem:[#allocation8 + $0xb0] sm:$0xff]
    %v1417 = vld [vmem:[#allocation8 + $0xb8] sm:$0xff]
    %v1418 = vld [vmem:[#allocation8 + $0xc0] sm:$0xff]
    %v1419 = vld [vmem:[#allocation8 + $0xc8] sm:$0xff]
    %v1420 = vld [vmem:[#allocation8 + $0xd0] sm:$0xff]
    %v1421 = vld [vmem:[#allocation8 + $0xd8] sm:$0xff]
    %v1422 = vld [vmem:[#allocation8 + $0xe0] sm:$0xff]
    %v1423 = vld [vmem:[#allocation8 + $0xe8] sm:$0xff]
    %v1424 = vld [vmem:[#allocation8 + $0xf0] sm:$0xff]
    %v1425 = vld [vmem:[#allocation8 + $0xf8] sm:$0xff]
    %v1426 = vld [vmem:[#allocation8 + $0x100] sm:$0xff]
    %v1427 = vld [vmem:[#allocation8 + $0x108] sm:$0xff]
    %v1428 = vld [vmem:[#allocation8 + $0x110] sm:$0xff]
    %v1429 = vld [vmem:[#allocation8 + $0x118] sm:$0xff]
    %v1430 = vld [vmem:[#allocation8 + $0x120] sm:$0xff]
    %v1431 = vld [vmem:[#allocation8 + $0x128] sm:$0xff]
    %v1432 = vld [vmem:[#allocation8 + $0x130] sm:$0xff]
    %v1433 = vld [vmem:[#allocation8 + $0x138] sm:$0xff]
    %v1434 = vld [vmem:[#allocation8 + $0x140] sm:$0xff]
    %v1435 = vld [vmem:[#allocation8 + $0x148] sm:$0xff]
    %v1436 = vld [vmem:[#allocation8 + $0x150] sm:$0xff]
    %v1437 = vld [vmem:[#allocation8 + $0x158] sm:$0xff]
    %v1438 = vld [vmem:[#allocation8 + $0x160] sm:$0xff]
    %v1439 = vld [vmem:[#allocation8 + $0x168] sm:$0xff]
    %v1440 = vld [vmem:[#allocation8 + $0x170] sm:$0xff]
    %v1441 = vld [vmem:[#allocation8 + $0x178] sm:$0xff]
    %v1442 = vld [vmem:[#allocation8 + $0x180] sm:$0xff]
    %v1443 = vld [vmem:[#allocation8 + $0x188] sm:$0xff]
    %v1444 = vld [vmem:[#allocation8 + $0x190] sm:$0xff]
    %v1445 = vld [vmem:[#allocation8 + $0x198] sm:$0xff]
    %v1446 = vld [vmem:[#allocation8 + $0x1a0] sm:$0xff]
    %v1447 = vld [vmem:[#allocation8 + $0x1a8] sm:$0xff]
    %v1448 = vld [vmem:[#allocation8 + $0x1b0] sm:$0xff]
    %v1449 = vld [vmem:[#allocation8 + $0x1b8] sm:$0xff]
    %v1450 = vld [vmem:[#allocation8 + $0x1c0] sm:$0xff]
    %v1451 = vld [vmem:[#allocation8 + $0x1c8] sm:$0xff]
    %v1452 = vld [vmem:[#allocation8 + $0x1d0] sm:$0xff]
    %v1453 = vld [vmem:[#allocation8 + $0x1d8] sm:$0xff]
    %v1454 = vld [vmem:[#allocation8 + $0x1e0] sm:$0xff]
    %v1455 = vld [vmem:[#allocation8 + $0x1e8] sm:$0xff]
    %v1456 = vld [vmem:[#allocation8 + $0x1f0] sm:$0xff]
    %v1457 = vld [vmem:[#allocation8 + $0x1f8] sm:$0xff]
    %v1458 = vld [vmem:[#allocation8 + $0x200] sm:$0xff]
    %v1459 = vld [vmem:[#allocation8 + $0x208] sm:$0xff]
    %v1460 = vld [vmem:[#allocation8 + $0x210] sm:$0xff]
    %v1461 = vld [vmem:[#allocation8 + $0x218] sm:$0xff]
    %v1462 = vld [vmem:[#allocation8 + $0x220] sm:$0xff]
    %v1463 = vld [vmem:[#allocation8 + $0x228] sm:$0xff]
    %v1464 = vld [vmem:[#allocation8 + $0x230] sm:$0xff]
    %v1465 = vld [vmem:[#allocation8 + $0x238] sm:$0xff]
    %v1466 = vld [vmem:[#allocation8 + $0x240] sm:$0xff]
    %v1467 = vld [vmem:[#allocation8 + $0x248] sm:$0xff]
    %v1468 = vld [vmem:[#allocation8 + $0x250] sm:$0xff]
    %v1469 = vld [vmem:[#allocation8 + $0x258] sm:$0xff]
    %v1470 = vld [vmem:[#allocation8 + $0x260] sm:$0xff]
    %v1471 = vld [vmem:[#allocation8 + $0x268] sm:$0xff]
    %v1472 = vld [vmem:[#allocation8 + $0x270] sm:$0xff]
    %v1473 = vld [vmem:[#allocation8 + $0x278] sm:$0xff]
    %v1474 = vld [vmem:[#allocation8 + $0x280] sm:$0xff]
    %v1475 = vld [vmem:[#allocation8 + $0x288] sm:$0xff]
    %v1476 = vld [vmem:[#allocation8 + $0x290] sm:$0xff]
    %v1477 = vld [vmem:[#allocation8 + $0x298] sm:$0xff]
    %v1478 = vld [vmem:[#allocation8 + $0x2a0] sm:$0xff]
    %v1479 = vld [vmem:[#allocation8 + $0x2a8] sm:$0xff]
    %v1480 = vld [vmem:[#allocation8 + $0x2b0] sm:$0xff]
    %v1481 = vld [vmem:[#allocation8 + $0x2b8] sm:$0xff]
    %v1482 = vld [vmem:[#allocation8 + $0x2c0] sm:$0xff]
    %v1483 = vld [vmem:[#allocation8 + $0x2c8] sm:$0xff]
    %v1484 = vld [vmem:[#allocation8 + $0x2d0] sm:$0xff]
    %v1485 = vld [vmem:[#allocation8 + $0x2d8] sm:$0xff]
    %v1486 = vld [vmem:[#allocation8 + $0x2e0] sm:$0xff]
    %v1487 = vld [vmem:[#allocation8 + $0x2e8] sm:$0xff]
    %v1488 = vld [vmem:[#allocation8 + $0x2f0] sm:$0xff]
    %v1489 = vld [vmem:[#allocation8 + $0x2f8] sm:$0xff]
    %v1490 = vld [vmem:[#allocation8 + $0x300] sm:$0xff]
    %v1491 = vld [vmem:[#allocation8 + $0x308] sm:$0xff]
    %v1492 = vld [vmem:[#allocation8 + $0x310] sm:$0xff]
    %v1493 = vld [vmem:[#allocation8 + $0x318] sm:$0xff]
    %v1494 = vld [vmem:[#allocation8 + $0x320] sm:$0xff]
    %v1495 = vld [vmem:[#allocation8 + $0x328] sm:$0xff]
    %v1496 = vld [vmem:[#allocation8 + $0x330] sm:$0xff]
    %v1497 = vld [vmem:[#allocation8 + $0x338] sm:$0xff]
    %v1498 = vld [vmem:[#allocation8 + $0x340] sm:$0xff]
    %v1499 = vld [vmem:[#allocation8 + $0x348] sm:$0xff]
    %v1500 = vld [vmem:[#allocation8 + $0x350] sm:$0xff]
    %v1501 = vld [vmem:[#allocation8 + $0x358] sm:$0xff]
    %v1502 = vld [vmem:[#allocation8 + $0x360] sm:$0xff]
    %v1503 = vld [vmem:[#allocation8 + $0x368] sm:$0xff]
    %v1504 = vld [vmem:[#allocation8 + $0x370] sm:$0xff]
    %v1505 = vld [vmem:[#allocation8 + $0x378] sm:$0xff]
    %v1506 = vld [vmem:[#allocation8 + $0x380] sm:$0xff]
    %v1507 = vld [vmem:[#allocation8 + $0x388] sm:$0xff]
    %v1508 = vld [vmem:[#allocation8 + $0x390] sm:$0xff]
    %v1509 = vld [vmem:[#allocation8 + $0x398] sm:$0xff]
    %v1510 = vld [vmem:[#allocation8 + $0x3a0] sm:$0xff]
    %v1511 = vld [vmem:[#allocation8 + $0x3a8] sm:$0xff]
    %v1512 = vld [vmem:[#allocation8 + $0x3b0] sm:$0xff]
    %v1513 = vld [vmem:[#allocation8 + $0x3b8] sm:$0xff]
    %v1514 = vld [vmem:[#allocation8 + $0x3c0] sm:$0xff]
    %v1515 = vld [vmem:[#allocation8 + $0x3c8] sm:$0xff]
    %v1516 = vld [vmem:[#allocation8 + $0x3d0] sm:$0xff]
    %v1517 = vld [vmem:[#allocation8 + $0x3d8] sm:$0xff]
    %v1518 = vld [vmem:[#allocation8 + $0x3e0] sm:$0xff]
    %v1519 = vld [vmem:[#allocation8 + $0x3e8] sm:$0xff]
    %v1520 = vld [vmem:[#allocation8 + $0x3f0] sm:$0xff]
    %v1521 = vld [vmem:[#allocation8 + $0x3f8] sm:$0xff]
    %v1522 = vld [vmem:[%s5] sm:$0x3]
    %v1524 = vlaneseq
    %v1525 = vshrl.u32 %v1524, 7
    %v1526 = vsub.s32 0, %v1525
    %v1527 = vrot.slane %v1522, %v1526
    %v1528 = vlaneseq
    %v1529 = vshrl.u32 %v1528, 7
    %v1530 = vsub.s32 1, %v1529
    %v1531 = vrot.slane %v1522, %v1530
    %v1566 = vrot.slane %v1366, 7
    %v1567 = vsel %vm1012, %v1566, %v1362
    %v1568 = vrot.slane %v1370, 6
    %v1569 = vsel %vm1014, %v1568, %v1567
    %v1570 = vrot.slane %v1374, 5
    %v1571 = vsel %vm1016, %v1570, %v1569
    %v1572 = vrot.slane %v1378, 4
    %v1573 = vsel %vm1018, %v1572, %v1571
    %v1574 = vrot.slane %v1382, 3
    %v1575 = vsel %vm1020, %v1574, %v1573
    %v1576 = vrot.slane %v1386, 2
    %v1577 = vsel %vm1022, %v1576, %v1575
    %v1578 = vrot.slane %v1390, 1
    %v1579 = vsel %vm1024, %v1578, %v1577
    %v1580 = vrot.slane %v1367, 7
    %v1581 = vsel %vm1012, %v1580, %v1363
    %v1582 = vrot.slane %v1371, 6
    %v1583 = vsel %vm1014, %v1582, %v1581
    %v1584 = vrot.slane %v1375, 5
    %v1585 = vsel %vm1016, %v1584, %v1583
    %v1586 = vrot.slane %v1379, 4
    %v1587 = vsel %vm1018, %v1586, %v1585
    %v1588 = vrot.slane %v1383, 3
    %v1589 = vsel %vm1020, %v1588, %v1587
    %v1590 = vrot.slane %v1387, 2
    %v1591 = vsel %vm1022, %v1590, %v1589
    %v1592 = vrot.slane %v1391, 1
    %v1593 = vsel %vm1024, %v1592, %v1591
    %v1594 = vrot.slane %v1368, 7
    %v1595 = vsel %vm1012, %v1594, %v1364
    %v1596 = vrot.slane %v1372, 6
    %v1597 = vsel %vm1014, %v1596, %v1595
    %v1598 = vrot.slane %v1376, 5
    %v1599 = vsel %vm1016, %v1598, %v1597
    %v1600 = vrot.slane %v1380, 4
    %v1601 = vsel %vm1018, %v1600, %v1599
    %v1602 = vrot.slane %v1384, 3
    %v1603 = vsel %vm1020, %v1602, %v1601
    %v1604 = vrot.slane %v1388, 2
    %v1605 = vsel %vm1022, %v1604, %v1603
    %v1606 = vrot.slane %v1392, 1
    %v1607 = vsel %vm1024, %v1606, %v1605
    %v1608 = vrot.slane %v1369, 7
    %v1609 = vsel %vm1012, %v1608, %v1365
    %v1610 = vrot.slane %v1373, 6
    %v1611 = vsel %vm1014, %v1610, %v1609
    %v1612 = vrot.slane %v1377, 5
    %v1613 = vsel %vm1016, %v1612, %v1611
    %v1614 = vrot.slane %v1381, 4
    %v1615 = vsel %vm1018, %v1614, %v1613
    %v1616 = vrot.slane %v1385, 3
    %v1617 = vsel %vm1020, %v1616, %v1615
    %v1618 = vrot.slane %v1389, 2
    %v1619 = vsel %vm1022, %v1618, %v1617
    %v1620 = vrot.slane %v1393, 1
    %v1621 = vsel %vm1024, %v1620, %v1619
    %1626 = vmatprep.subr.mxu0 %v1425
    %1627 = vmatpush1.msra.mxu0 %v1424
    %1628 = vmatprep.subr.mxu0 %v1423
    %1629 = vmatpush1.msra.mxu0 %v1422
    %1630 = vmatprep.subr.mxu0 %v1421
    %1631 = vmatpush1.msra.mxu0 %v1420
    %1632 = vmatprep.subr.mxu0 %v1419
    %1633 = vmatpush1.msra.mxu0 %v1418
    %1634 = vmatprep.subr.mxu0 %v1417
    %1635 = vmatpush1.msra.mxu0 %v1416
    %1636 = vmatprep.subr.mxu0 %v1415
    %1637 = vmatpush1.msra.mxu0 %v1414
    %1638 = vmatprep.subr.mxu0 %v1413
    %1639 = vmatpush1.msra.mxu0 %v1412
    %1640 = vmatprep.subr.mxu0 %v1411
    %1641 = vmatpush1.msra.mxu0 %v1410
    %1642 = vmatprep.subr.mxu0 %v1409
    %1643 = vmatpush1.msra.mxu0 %v1408
    %1644 = vmatprep.subr.mxu0 %v1407
    %1645 = vmatpush1.msra.mxu0 %v1406
    %1646 = vmatprep.subr.mxu0 %v1405
    %1647 = vmatpush1.msra.mxu0 %v1404
    %1648 = vmatprep.subr.mxu0 %v1403
    %1649 = vmatpush1.msra.mxu0 %v1402
    %1650 = vmatprep.subr.mxu0 %v1401
    %1651 = vmatpush1.msra.mxu0 %v1400
    %1652 = vmatprep.subr.mxu0 %v1399
    %1653 = vmatpush1.msra.mxu0 %v1398
    %1654 = vmatprep.subr.mxu0 %v1397
    %1655 = vmatpush1.msra.mxu0 %v1396
    %1656 = vmatprep.subr.mxu0 %v1395
    %1657 = vmatpush1.msra.mxu0 %v1394
    %1658 = vmatprep.subr.mxu0 %v1457
    %1659 = vmatpush2.msra.mxu0 %v1456
    %1660 = vmatprep.subr.mxu0 %v1455
    %1661 = vmatpush2.msra.mxu0 %v1454
    %1662 = vmatprep.subr.mxu0 %v1453
    %1663 = vmatpush2.msra.mxu0 %v1452
    %1664 = vmatprep.subr.mxu0 %v1451
    %1665 = vmatpush2.msra.mxu0 %v1450
    %1666 = vmatprep.subr.mxu0 %v1449
    %1667 = vmatpush2.msra.mxu0 %v1448
    %1668 = vmatprep.subr.mxu0 %v1447
    %1669 = vmatpush2.msra.mxu0 %v1446
    %1670 = vmatprep.subr.mxu0 %v1445
    %1671 = vmatpush2.msra.mxu0 %v1444
    %1672 = vmatprep.subr.mxu0 %v1443
    %1673 = vmatpush2.msra.mxu0 %v1442
    %1674 = vmatprep.subr.mxu0 %v1441
    %1675 = vmatpush2.msra.mxu0 %v1440
    %1676 = vmatprep.subr.mxu0 %v1439
    %1677 = vmatpush2.msra.mxu0 %v1438
    %1678 = vmatprep.subr.mxu0 %v1437
    %1679 = vmatpush2.msra.mxu0 %v1436
    %1680 = vmatprep.subr.mxu0 %v1435
    %1681 = vmatpush2.msra.mxu0 %v1434
    %1682 = vmatprep.subr.mxu0 %v1433
    %1683 = vmatpush2.msra.mxu0 %v1432
    %1684 = vmatprep.subr.mxu0 %v1431
    %1685 = vmatpush2.msra.mxu0 %v1430
    %1686 = vmatprep.subr.mxu0 %v1429
    %1687 = vmatpush2.msra.mxu0 %v1428
    %1688 = vmatprep.subr.mxu0 %v1427
    %1689 = vmatpush2.msra.mxu0 %v1426
    %1690 = vmatprep.mubr.f32.mxu0 %v1593
    %1691 = vmatmul.mubr.f32.gmra.mxu0 %v1579
    %v1692 = vpop.f32.mrf.mxu0
    %v1693 = vadd.f32 %v1527, %v1692
    %v1694 = vpop.f32.mrf.mxu0
    %v1695 = vadd.f32 %v1531, %v1694
    %1696 = vdwg.mxu0
    %1697 = vmatprep.subr.mxu0 %v1489
    %1698 = vmatpush1.msra.mxu0 %v1488
    %1699 = vmatprep.subr.mxu0 %v1487
    %1700 = vmatpush1.msra.mxu0 %v1486
    %1701 = vmatprep.subr.mxu0 %v1485
    %1702 = vmatpush1.msra.mxu0 %v1484
    %1703 = vmatprep.subr.mxu0 %v1483
    %1704 = vmatpush1.msra.mxu0 %v1482
    %1705 = vmatprep.subr.mxu0 %v1481
    %1706 = vmatpush1.msra.mxu0 %v1480
    %1707 = vmatprep.subr.mxu0 %v1479
    %1708 = vmatpush1.msra.mxu0 %v1478
    %1709 = vmatprep.subr.mxu0 %v1477
    %1710 = vmatpush1.msra.mxu0 %v1476
    %1711 = vmatprep.subr.mxu0 %v1475
    %1712 = vmatpush1.msra.mxu0 %v1474
    %1713 = vmatprep.subr.mxu0 %v1473
    %1714 = vmatpush1.msra.mxu0 %v1472
    %1715 = vmatprep.subr.mxu0 %v1471
    %1716 = vmatpush1.msra.mxu0 %v1470
    %1717 = vmatprep.subr.mxu0 %v1469
    %1718 = vmatpush1.msra.mxu0 %v1468
    %1719 = vmatprep.subr.mxu0 %v1467
    %1720 = vmatpush1.msra.mxu0 %v1466
    %1721 = vmatprep.subr.mxu0 %v1465
    %1722 = vmatpush1.msra.mxu0 %v1464
    %1723 = vmatprep.subr.mxu0 %v1463
    %1724 = vmatpush1.msra.mxu0 %v1462
    %1725 = vmatprep.subr.mxu0 %v1461
    %1726 = vmatpush1.msra.mxu0 %v1460
    %1727 = vmatprep.subr.mxu0 %v1459
    %1728 = vmatpush1.msra.mxu0 %v1458
    %1729 = vmatprep.subr.mxu0 %v1521
    %1730 = vmatpush2.msra.mxu0 %v1520
    %1731 = vmatprep.subr.mxu0 %v1519
    %1732 = vmatpush2.msra.mxu0 %v1518
    %1733 = vmatprep.subr.mxu0 %v1517
    %1734 = vmatpush2.msra.mxu0 %v1516
    %1735 = vmatprep.subr.mxu0 %v1515
    %1736 = vmatpush2.msra.mxu0 %v1514
    %1737 = vmatprep.subr.mxu0 %v1513
    %1738 = vmatpush2.msra.mxu0 %v1512
    %1739 = vmatprep.subr.mxu0 %v1511
    %1740 = vmatpush2.msra.mxu0 %v1510
    %1741 = vmatprep.subr.mxu0 %v1509
    %1742 = vmatpush2.msra.mxu0 %v1508
    %1743 = vmatprep.subr.mxu0 %v1507
    %1744 = vmatpush2.msra.mxu0 %v1506
    %1745 = vmatprep.subr.mxu0 %v1505
    %1746 = vmatpush2.msra.mxu0 %v1504
    %1747 = vmatprep.subr.mxu0 %v1503
    %1748 = vmatpush2.msra.mxu0 %v1502
    %1749 = vmatprep.subr.mxu0 %v1501
    %1750 = vmatpush2.msra.mxu0 %v1500
    %1751 = vmatprep.subr.mxu0 %v1499
    %1752 = vmatpush2.msra.mxu0 %v1498
    %1753 = vmatprep.subr.mxu0 %v1497
    %1754 = vmatpush2.msra.mxu0 %v1496
    %1755 = vmatprep.subr.mxu0 %v1495
    %1756 = vmatpush2.msra.mxu0 %v1494
    %1757 = vmatprep.subr.mxu0 %v1493
    %1758 = vmatpush2.msra.mxu0 %v1492
    %1759 = vmatprep.subr.mxu0 %v1491
    %1760 = vmatpush2.msra.mxu0 %v1490
    %1761 = vmatprep.mubr.f32.mxu0 %v1621
    %1762 = vmatmul.mubr.f32.gmra.mxu0 %v1607
    %v1763 = vpop.f32.mrf.mxu0
    %v1764 = vadd.f32 %v1693, %v1763
    %v1765 = vpop.f32.mrf.mxu0
    %v1766 = vadd.f32 %v1695, %v1765
    %1767 = vdwg.mxu0
    %v1768 = vmax.f32 %v1764, 0.0
    %v1769 = vmax.f32 %v1766, 0.0
    %v1770 = vld [vmem:[#allocation10] sm:$0xff]
    %v1771 = vld [vmem:[#allocation10 + $0x8] sm:$0xff]
    %v1772 = vld [vmem:[#allocation10 + $0x10] sm:$0xff]
    %v1773 = vld [vmem:[#allocation10 + $0x18] sm:$0xff]
    %v1774 = vld [vmem:[#allocation10 + $0x20] sm:$0xff]
    %v1775 = vld [vmem:[#allocation10 + $0x28] sm:$0xff]
    %v1776 = vld [vmem:[#allocation10 + $0x30] sm:$0xff]
    %v1777 = vld [vmem:[#allocation10 + $0x38] sm:$0xff]
    %v1778 = vld [vmem:[#allocation10 + $0x40] sm:$0xff]
    %v1779 = vld [vmem:[#allocation10 + $0x48] sm:$0xff]
    %v1780 = vld [vmem:[#allocation10 + $0x50] sm:$0xff]
    %v1781 = vld [vmem:[#allocation10 + $0x58] sm:$0xff]
    %v1782 = vld [vmem:[#allocation10 + $0x60] sm:$0xff]
    %v1783 = vld [vmem:[#allocation10 + $0x68] sm:$0xff]
    %v1784 = vld [vmem:[#allocation10 + $0x70] sm:$0xff]
    %v1785 = vld [vmem:[#allocation10 + $0x78] sm:$0xff]
    %v1786 = vld [vmem:[#allocation10 + $0x80] sm:$0xff]
    %v1787 = vld [vmem:[#allocation10 + $0x88] sm:$0xff]
    %v1788 = vld [vmem:[#allocation10 + $0x90] sm:$0xff]
    %v1789 = vld [vmem:[#allocation10 + $0x98] sm:$0xff]
    %v1790 = vld [vmem:[#allocation10 + $0xa0] sm:$0xff]
    %v1791 = vld [vmem:[#allocation10 + $0xa8] sm:$0xff]
    %v1792 = vld [vmem:[#allocation10 + $0xb0] sm:$0xff]
    %v1793 = vld [vmem:[#allocation10 + $0xb8] sm:$0xff]
    %v1794 = vld [vmem:[#allocation10 + $0xc0] sm:$0xff]
    %v1795 = vld [vmem:[#allocation10 + $0xc8] sm:$0xff]
    %v1796 = vld [vmem:[#allocation10 + $0xd0] sm:$0xff]
    %v1797 = vld [vmem:[#allocation10 + $0xd8] sm:$0xff]
    %v1798 = vld [vmem:[#allocation10 + $0xe0] sm:$0xff]
    %v1799 = vld [vmem:[#allocation10 + $0xe8] sm:$0xff]
    %v1800 = vld [vmem:[#allocation10 + $0xf0] sm:$0xff]
    %v1801 = vld [vmem:[#allocation10 + $0xf8] sm:$0xff]
    %v1802 = vld [vmem:[%s7] sm:$0x1]
    %v1804 = vlaneseq
    %v1805 = vshrl.u32 %v1804, 7
    %v1806 = vsub.s32 0, %v1805
    %v1807 = vrot.slane %v1802, %v1806
    %1809 = vmatprep.subr.mxu0 0.0
    %1810 = vmatpush1.msra.mxu0 %v1785
    %1811 = vmatprep.subr.mxu0 0.0
    %1812 = vmatpush1.msra.mxu0 %v1784
    %1813 = vmatprep.subr.mxu0 0.0
    %1814 = vmatpush1.msra.mxu0 %v1783
    %1815 = vmatprep.subr.mxu0 0.0
    %1816 = vmatpush1.msra.mxu0 %v1782
    %1817 = vmatprep.subr.mxu0 0.0
    %1818 = vmatpush1.msra.mxu0 %v1781
    %1819 = vmatprep.subr.mxu0 0.0
    %1820 = vmatpush1.msra.mxu0 %v1780
    %1821 = vmatprep.subr.mxu0 0.0
    %1822 = vmatpush1.msra.mxu0 %v1779
    %1823 = vmatprep.subr.mxu0 0.0
    %1824 = vmatpush1.msra.mxu0 %v1778
    %1825 = vmatprep.subr.mxu0 0.0
    %1826 = vmatpush1.msra.mxu0 %v1777
    %1827 = vmatprep.subr.mxu0 0.0
    %1828 = vmatpush1.msra.mxu0 %v1776
    %1829 = vmatprep.subr.mxu0 0.0
    %1830 = vmatpush1.msra.mxu0 %v1775
    %1831 = vmatprep.subr.mxu0 0.0
    %1832 = vmatpush1.msra.mxu0 %v1774
    %1833 = vmatprep.subr.mxu0 0.0
    %1834 = vmatpush1.msra.mxu0 %v1773
    %1835 = vmatprep.subr.mxu0 0.0
    %1836 = vmatpush1.msra.mxu0 %v1772
    %1837 = vmatprep.subr.mxu0 0.0
    %1838 = vmatpush1.msra.mxu0 %v1771
    %1839 = vmatprep.subr.mxu0 0.0
    %1840 = vmatpush1.msra.mxu0 %v1770
    %1841 = vmatprep.subr.mxu0 0.0
    %1842 = vmatpush2.msra.mxu0 %v1801
    %1843 = vmatprep.subr.mxu0 0.0
    %1844 = vmatpush2.msra.mxu0 %v1800
    %1845 = vmatprep.subr.mxu0 0.0
    %1846 = vmatpush2.msra.mxu0 %v1799
    %1847 = vmatprep.subr.mxu0 0.0
    %1848 = vmatpush2.msra.mxu0 %v1798
    %1849 = vmatprep.subr.mxu0 0.0
    %1850 = vmatpush2.msra.mxu0 %v1797
    %1851 = vmatprep.subr.mxu0 0.0
    %1852 = vmatpush2.msra.mxu0 %v1796
    %1853 = vmatprep.subr.mxu0 0.0
    %1854 = vmatpush2.msra.mxu0 %v1795
    %1855 = vmatprep.subr.mxu0 0.0
    %1856 = vmatpush2.msra.mxu0 %v1794
    %1857 = vmatprep.subr.mxu0 0.0
    %1858 = vmatpush2.msra.mxu0 %v1793
    %1859 = vmatprep.subr.mxu0 0.0
    %1860 = vmatpush2.msra.mxu0 %v1792
    %1861 = vmatprep.subr.mxu0 0.0
    %1862 = vmatpush2.msra.mxu0 %v1791
    %1863 = vmatprep.subr.mxu0 0.0
    %1864 = vmatpush2.msra.mxu0 %v1790
    %1865 = vmatprep.subr.mxu0 0.0
    %1866 = vmatpush2.msra.mxu0 %v1789
    %1867 = vmatprep.subr.mxu0 0.0
    %1868 = vmatpush2.msra.mxu0 %v1788
    %1869 = vmatprep.subr.mxu0 0.0
    %1870 = vmatpush2.msra.mxu0 %v1787
    %1871 = vmatprep.subr.mxu0 0.0
    %1872 = vmatpush2.msra.mxu0 %v1786
    %1873 = vmatprep.mubr.f32.mxu0 %v1769
    %1874 = vmatmul.mubr.f32.gmra.mxu0 %v1768
    %v1875 = vpop.f32.mrf.mxu0
    %v1876 = vadd.f32 %v1807, %v1875
    %v1877 = vpop.f32.mrf.mxu0
    %1878 = vdwg.mxu0
    %1879 = vst [vmem:[#allocation11] sm:$0xff] %v1876
    // Predicated region
    $region54: #{tpu_custom_call.1} parent=1 // pred_check
      _
    $region55: #{tpu_custom_call.1} parent=1 // pred_check_branch
      %1881 = sbr.rel (0) target = $region57
    $region56: #{tpu_custom_call.1} parent=1 // pred_region
      %s1883 = ssub.s32 128, 128
      %1884 = vsyncadd [#allocation4], %s1883
      %s1886 = sshll.u32 [#allocation11], 4
      %s1887 = int_to_ptr.vmem [resolvable:$true] %s1886
      %1889 = dma.vmem_to_hbm [thread:$0]  %s1887, 128, %s8, [#allocation4]
    $region57: #{tpu_custom_call.1} parent=1 // pred_fallthru
      _
    // Predicated region
    $region58: #{tpu_custom_call.1} parent=1 // pred_check
      _
    $region59: #{tpu_custom_call.1} parent=1 // pred_check_branch
      %1891 = sbr.rel (0) target = $region61
    $region60: #{tpu_custom_call.1} parent=1 // pred_region
      %1892 = dma.done [#allocation4], 128
    $region61: #{tpu_custom_call.1} parent=1 // pred_fallthru
      _
    %1893 = vsyncpa [#allocation3], 1
    %1894 = vsyncpa [#allocation6], 1
    %1895 = vsyncpa [#allocation9], 1
    %1896 = vsyncpa [#allocation4], 1

</llo_original>
